<compile_context>
chip_gen: v5e
topology: v5e:2x2
jax: 0.10.0
libtpu: 0.0.40
codegen_flags: <defaults>
</compile_context>

<pallas_src>
import jax
import jax.numpy as jnp
from jax.experimental import pallas as pl
from jax.experimental.pallas import tpu as pltpu


def _gelu_exact(x):
    """Exact (erf-based) GELU, matching PyTorch nn.GELU's default.

    erf via Abramowitz & Stegun 7.1.26 (max abs err 1.5e-7), using only
    elementwise ops (abs / div / exp / mul / add / where) that are guaranteed
    to lower in Pallas TPU.
    """
    a1, a2, a3, a4, a5 = (0.254829592, -0.284496736, 1.421413741,
                          -1.453152027, 1.061405429)
    p = 0.3275911
    z = x * 0.7071067811865476          # x / sqrt(2)
    az = jnp.abs(z)
    t = 1.0 / (1.0 + p * az)
    poly = ((((a5 * t + a4) * t + a3) * t + a2) * t + a1) * t
    erf_abs = 1.0 - poly * jnp.exp(-az * az)
    erf_z = jnp.where(z < 0.0, -erf_abs, erf_abs)
    return 0.5 * x * (1.0 + erf_z)


def _residual_ffn_kernel(x_ref, w1_ref, b1_ref, w2_ref, b2_ref, o_ref, acc_ref):
    # x_ref : (tm, D) input dtype        (block constant along the h axis)
    # w1_ref: (D, th) bf16, b1_ref: (1, th) f32   (streamed per H-chunk)
    # w2_ref: (th, D) bf16, b2_ref: (1, D) f32    (b2 resident)
    # o_ref : (tm, D) output dtype
    # acc_ref: (tm, D) f32 VMEM scratch accumulator
    h_idx = pl.program_id(1)

    @pl.when(h_idx == 0)
    def _init():
        acc_ref[...] = jnp.zeros_like(acc_ref)

    x = x_ref[...]

    # First matmul on this H-chunk: bf16 MXU operands, f32 accumulation.
    h = jnp.dot(x.astype(w1_ref.dtype), w1_ref[...],
                preferred_element_type=jnp.float32) + b1_ref[...]
    # Exact GELU in f32 (EUP exp + VPU), then one downcast for the MXU operand.
    h = _gelu_exact(h)

    # Second matmul: accumulate this chunk's contribution in f32.
    acc_ref[...] += jnp.dot(h.astype(w2_ref.dtype), w2_ref[...],
                            preferred_element_type=jnp.float32)

    @pl.when(h_idx == pl.num_programs(1) - 1)
    def _finalize():
        # Bias + residual in f32, single lane-dense store per (tm, D) tile.
        o_ref[...] = (acc_ref[...] + b2_ref[...]
                      + x.astype(jnp.float32)).astype(o_ref.dtype)


def _pick_hidden_chunk(H, desired):
    """Largest multiple of 128 that divides H and is <= desired (else H)."""
    if H <= desired or H % 128 != 0:
        return H
    c = min((desired // 128) * 128, H)
    while c >= 128:
        if H % c == 0:
            return c
        c -= 128
    return H


def residual_ffn(x, w1, b1, w2, b2, *, tm=256, th=512):
    """x: (B, N, D) -> (B, N, D).  Computes FFN(x) + x fully inside Pallas.

    Pass w1/w2 already in bfloat16 (cast once at parameter load); f32 weights
    are accepted and cast here as a fallback.  If the surrounding model runs
    in bf16, pass x in bf16: the residual add still happens in f32 in-kernel
    and the output follows x.dtype.
    """
    B, N, D = x.shape
    H = w1.shape[1]
    M = B * N
    x2 = x.reshape(M, D)

    w1b = w1 if w1.dtype == jnp.bfloat16 else w1.astype(jnp.bfloat16)
    w2b = w2 if w2.dtype == jnp.bfloat16 else w2.astype(jnp.bfloat16)
    b1f = jnp.asarray(b1, jnp.float32).reshape(1, H)
    b2f = jnp.asarray(b2, jnp.float32).reshape(1, D)

    # --- tile selection -----------------------------------------------------
    # Token tile: multiple of 16 (bf16 sublane packing); tiles that divide M
    # avoid a masked (wasted-MXU-work) last tile but a ragged tile is correct.
    tm = min(tm, M)
    if tm < M:
        tm = max(16, (tm // 16) * 16)
    grid_m = pl.cdiv(M, tm)

    # Hidden chunk must divide H exactly (padded chunks would feed garbage
    # into the accumulator).
    th = _pick_hidden_chunk(H, th)
    grid_h = H // th

    # --- VMEM budget ----------------------------------------------------------
    x_bytes = jnp.dtype(x.dtype).itemsize
    est = (2 * tm * D * x_bytes              # double-buffered x tiles
           + 2 * tm * D * x_bytes            # double-buffered out tiles
           + 2 * (D * th + th * D) * 2       # double-buffered bf16 weight chunks
           + 2 * (th + D) * 4                # biases
           + tm * D * 4                      # f32 accumulator scratch
           + tm * th * (4 + 2))              # f32 GELU intermediate + bf16 copy
    try:
        info = pltpu.get_tpu_info()
        vmem_cap = int(getattr(info, "vmem_capacity_bytes", 64 * 1024 * 1024))
    except Exception:
        vmem_cap = 64 * 1024 * 1024          # v7x per-TC floor
    vmem_limit = int(min(max(2 * est, 32 * 1024 * 1024),
                         vmem_cap - 8 * 1024 * 1024))

    # --- cost hint for XLA scheduling ----------------------------------------
    cost = pl.CostEstimate(
        flops=4 * M * D * H,                 # two (M,D)x(D,H)-class matmuls
        transcendentals=M * H,               # one exp per GELU element
        bytes_accessed=(2 * M * D * x_bytes              # x in + out
                        + grid_m * 2 * D * H * 2         # bf16 weights re-streamed per row tile
                        + (H + D) * 4))

    out = pl.pallas_call(
        _residual_ffn_kernel,
        out_shape=jax.ShapeDtypeStruct((M, D), x.dtype),
        grid_spec=pltpu.PrefetchScalarGridSpec(
            num_scalar_prefetch=0,
            grid=(grid_m, grid_h),           # reduction (H) axis last
            in_specs=[
                pl.BlockSpec((tm, D), lambda i, h: (i, 0)),   # x tile
                pl.BlockSpec((D, th), lambda i, h: (0, h)),   # w1 H-chunk
                pl.BlockSpec((1, th), lambda i, h: (0, h)),   # b1 H-chunk
                pl.BlockSpec((th, D), lambda i, h: (h, 0)),   # w2 H-chunk
                pl.BlockSpec((1, D), lambda i, h: (0, 0)),    # b2 (resident)
            ],
            out_specs=pl.BlockSpec((tm, D), lambda i, h: (i, 0)),
            scratch_shapes=[pltpu.VMEM((tm, D), jnp.float32)],
        ),
        compiler_params=pltpu.CompilerParams(
            dimension_semantics=("parallel", "arbitrary"),
            vmem_limit_bytes=vmem_limit),
        cost_estimate=cost,
    )(x2, w1b, b1f, w2b, b2f)
    return out.reshape(B, N, D)


def reference(x, w1, b1, w2, b2):
    # Mirror the kernel's numerics: bf16 MXU operands, f32 accumulation,
    # exact-erf GELU, bias + residual add in f32.
    xb = x.astype(jnp.bfloat16).astype(jnp.float32)
    w1b = w1.astype(jnp.bfloat16).astype(jnp.float32)
    w2b = w2.astype(jnp.bfloat16).astype(jnp.float32)
    h = jax.nn.gelu(xb @ w1b + b1.reshape(1, 1, -1), approximate=False)
    hb = h.astype(jnp.bfloat16).astype(jnp.float32)
    y = hb @ w2b + b2.reshape(1, 1, -1)
    return y + x


if __name__ == "__main__":
    key = jax.random.PRNGKey(0)
    # Small but lane-dense shapes (D, H multiples of 128) so stores are
    # unmasked and MXU tiles aren't mostly padding.
    B, N, D, H = 2, 256, 128, 512
    k1, k2, k3, k4, k5 = jax.random.split(key, 5)

    x = jax.random.normal(k1, (B, N, D), dtype=jnp.float32)
    w1 = jax.random.normal(k2, (D, H), dtype=jnp.float32) * 0.05
    b1 = jax.random.normal(k3, (1, H), dtype=jnp.float32) * 0.01
    w2 = jax.random.normal(k4, (H, D), dtype=jnp.float32) * 0.05
    b2 = jax.random.normal(k5, (1, D), dtype=jnp.float32) * 0.01

    # bf16 weight cast done once at "parameter load" (hoisted out of the call).
    w1b = w1.astype(jnp.bfloat16)
    w2b = w2.astype(jnp.bfloat16)

    # tm=128, th=256 -> grid=(4, 2): exercises both the pipelined token axis
    # and the H-chunk accumulation path.
    y = residual_ffn(x, w1b, b1, w2b, b2, tm=128, th=256)
    jax.block_until_ready(y)

    y_ref = reference(x, w1, b1, w2, b2)
    err = float(jnp.max(jnp.abs(y - y_ref)))
    assert jnp.allclose(y, y_ref, atol=5e-3, rtol=5e-3), f"mismatch vs reference, max err {err}"

    print("KERNEL_OK")
</pallas_src>

<mosaic_0001>
module attributes {stable_mosaic.version = 11 : i64} {
  func.func @_residual_ffn_kernel(%arg0: i32, %arg1: i32, %arg2: memref<128x128xf32, #tpu.memory_space<vmem>>, %arg3: memref<128x256xbf16, #tpu.memory_space<vmem>>, %arg4: memref<1x256xf32, #tpu.memory_space<vmem>>, %arg5: memref<256x128xbf16, #tpu.memory_space<vmem>>, %arg6: memref<1x128xf32, #tpu.memory_space<vmem>>, %arg7: memref<128x128xf32, #tpu.memory_space<vmem>>, %arg8: memref<128x128xf32, #tpu.memory_space<vmem>>) attributes {dimension_semantics = [#tpu.dimension_semantics<parallel>, #tpu.dimension_semantics<arbitrary>], iteration_bounds = array<i64: 4, 2>, scalar_prefetch = 0 : i64, scratch_operands = 1 : i64, tpu.core_type = #tpu.core_type<tc>, window_params = [{transform_indices = @transform_0, window_bounds = array<i64: 128, 128>}, {transform_indices = @transform_1, window_bounds = array<i64: 128, 256>}, {transform_indices = @transform_2, window_bounds = array<i64: 1, 256>}, {transform_indices = @transform_3, window_bounds = array<i64: 256, 128>}, {pipeline_mode = #tpu.pipeline_mode<synchronous>, transform_indices = @transform_4, window_bounds = array<i64: 1, 128>}, {transform_indices = @transform_5, window_bounds = array<i64: 128, 128>}]} {
    %c0_i32 = arith.constant 0 : i32
    %0 = arith.cmpi eq, %arg1, %c0_i32 : i32
    %1 = arith.extui %0 : i1 to i32
    %c0_i32_0 = arith.constant 0 : i32
    %2 = arith.cmpi ne, %1, %c0_i32_0 : i32
    scf.if %2 {
      %cst_29 = arith.constant 0.000000e+00 : f32
      %59 = vector.broadcast %cst_29 : f32 to vector<128x128xf32>
      %c0_30 = arith.constant 0 : index
      %c0_31 = arith.constant 0 : index
      %60 = vector.load %arg8[%c0_30, %c0_31] : memref<128x128xf32, #tpu.memory_space<vmem>>, vector<128x128xf32>
      tpu.vector_store %arg8[%c0_30, %c0_31], %59 {strides = array<i32>} : memref<128x128xf32, #tpu.memory_space<vmem>>, vector<128x128xf32>,
    } else {
    }
    %c0 = arith.constant 0 : index
    %c0_1 = arith.constant 0 : index
    %3 = vector.load %arg2[%c0, %c0_1] : memref<128x128xf32, #tpu.memory_space<vmem>>, vector<128x128xf32>
    %4 = arith.truncf %3 : vector<128x128xf32> to vector<128x128xbf16>
    %c0_2 = arith.constant 0 : index
    %c0_3 = arith.constant 0 : index
    %5 = vector.load %arg3[%c0_2, %c0_3] : memref<128x256xbf16, #tpu.memory_space<vmem>>, vector<128x256xbf16>
    %cst = arith.constant dense<0.000000e+00> : vector<128x256xf32>
    %6 = tpu.matmul %4, %5, %cst {dimension_numbers = #tpu.dot_dimension_numbers<[1], [0], [0], [1], [0, 0, 1, 1], [], []>} : vector<128x128xbf16>, vector<128x256xbf16>, vector<128x256xf32> -> vector<128x256xf32>
    %c0_4 = arith.constant 0 : index
    %c0_5 = arith.constant 0 : index
    %7 = vector.load %arg4[%c0_4, %c0_5] : memref<1x256xf32, #tpu.memory_space<vmem>>, vector<1x256xf32>
    %8 = vector.broadcast %7 : vector<1x256xf32> to vector<128x256xf32>
    %9 = arith.addf %6, %8 : vector<128x256xf32>
    %cst_6 = arith.constant 0.707106769 : f32
    %10 = vector.broadcast %cst_6 : f32 to vector<128x256xf32>
    %11 = arith.mulf %9, %10 : vector<128x256xf32>
    %12 = math.absf %11 : vector<128x256xf32>
    %cst_7 = arith.constant 0.327591091 : f32
    %13 = vector.broadcast %cst_7 : f32 to vector<128x256xf32>
    %14 = arith.mulf %13, %12 : vector<128x256xf32>
    %cst_8 = arith.constant 1.000000e+00 : f32
    %15 = vector.broadcast %cst_8 : f32 to vector<128x256xf32>
    %16 = arith.addf %15, %14 : vector<128x256xf32>
    %cst_9 = arith.constant 1.000000e+00 : f32
    %17 = vector.broadcast %cst_9 : f32 to vector<128x256xf32>
    %18 = arith.divf %17, %16 : vector<128x256xf32>
    %cst_10 = arith.constant 1.06140542 : f32
    %19 = vector.broadcast %cst_10 : f32 to vector<128x256xf32>
    %20 = arith.mulf %19, %18 : vector<128x256xf32>
    %cst_11 = arith.constant -1.45315206 : f32
    %21 = vector.broadcast %cst_11 : f32 to vector<128x256xf32>
    %22 = arith.addf %20, %21 : vector<128x256xf32>
    %23 = arith.mulf %22, %18 : vector<128x256xf32>
    %cst_12 = arith.constant 1.42141378 : f32
    %24 = vector.broadcast %cst_12 : f32 to vector<128x256xf32>
    %25 = arith.addf %23, %24 : vector<128x256xf32>
    %26 = arith.mulf %25, %18 : vector<128x256xf32>
    %cst_13 = arith.constant -0.284496725 : f32
    %27 = vector.broadcast %cst_13 : f32 to vector<128x256xf32>
    %28 = arith.addf %26, %27 : vector<128x256xf32>
    %29 = arith.mulf %28, %18 : vector<128x256xf32>
    %cst_14 = arith.constant 0.254829586 : f32
    %30 = vector.broadcast %cst_14 : f32 to vector<128x256xf32>
    %31 = arith.addf %29, %30 : vector<128x256xf32>
    %32 = arith.mulf %31, %18 : vector<128x256xf32>
    %cst_15 = arith.constant 0.000000e+00 : f32
    %33 = vector.broadcast %cst_15 : f32 to vector<128x256xf32>
    %34 = arith.subf %33, %12 : vector<128x256xf32>
    %35 = arith.mulf %34, %12 : vector<128x256xf32>
    %36 = math.exp %35 : vector<128x256xf32>
    %37 = arith.mulf %32, %36 : vector<128x256xf32>
    %cst_16 = arith.constant 1.000000e+00 : f32
    %38 = vector.broadcast %cst_16 : f32 to vector<128x256xf32>
    %39 = arith.subf %38, %37 : vector<128x256xf32>
    %cst_17 = arith.constant 0.000000e+00 : f32
    %40 = vector.broadcast %cst_17 : f32 to vector<128x256xf32>
    %41 = arith.cmpf olt, %11, %40 : vector<128x256xf32>
    %cst_18 = arith.constant 0.000000e+00 : f32
    %42 = vector.broadcast %cst_18 : f32 to vector<128x256xf32>
    %43 = arith.subf %42, %39 : vector<128x256xf32>
    %44 = arith.select %41, %43, %39 : vector<128x256xi1>, vector<128x256xf32>
    %cst_19 = arith.constant 5.000000e-01 : f32
    %45 = vector.broadcast %cst_19 : f32 to vector<128x256xf32>
    %46 = arith.mulf %45, %9 : vector<128x256xf32>
    %cst_20 = arith.constant 1.000000e+00 : f32
    %47 = vector.broadcast %cst_20 : f32 to vector<128x256xf32>
    %48 = arith.addf %47, %44 : vector<128x256xf32>
    %49 = arith.mulf %46, %48 : vector<128x256xf32>
    %c0_21 = arith.constant 0 : index
    %c0_22 = arith.constant 0 : index
    %50 = vector.load %arg8[%c0_21, %c0_22] : memref<128x128xf32, #tpu.memory_space<vmem>>, vector<128x128xf32>
    %51 = arith.truncf %49 : vector<128x256xf32> to vector<128x256xbf16>
    %c0_23 = arith.constant 0 : index
    %c0_24 = arith.constant 0 : index
    %52 = vector.load %arg5[%c0_23, %c0_24] : memref<256x128xbf16, #tpu.memory_space<vmem>>, vector<256x128xbf16>
    %cst_25 = arith.constant dense<0.000000e+00> : vector<128x128xf32>
    %53 = tpu.matmul %51, %52, %cst_25 {dimension_numbers = #tpu.dot_dimension_numbers<[1], [0], [0], [1], [0, 0, 1, 1], [], []>} : vector<128x256xbf16>, vector<256x128xbf16>, vector<128x128xf32> -> vector<128x128xf32>
    %54 = arith.addf %50, %53 : vector<128x128xf32>
    %c0_26 = arith.constant 0 : index
    %c0_27 = arith.constant 0 : index
    %55 = vector.load %arg8[%c0_26, %c0_27] : memref<128x128xf32, #tpu.memory_space<vmem>>, vector<128x128xf32>
    tpu.vector_store %arg8[%c0_26, %c0_27], %54 {strides = array<i32>} : memref<128x128xf32, #tpu.memory_space<vmem>>, vector<128x128xf32>,
    %c1_i32 = arith.constant 1 : i32
    %56 = arith.cmpi eq, %arg1, %c1_i32 : i32
    %57 = arith.extui %56 : i1 to i32
    %c0_i32_28 = arith.constant 0 : i32
    %58 = arith.cmpi ne, %57, %c0_i32_28 : i32
    scf.if %58 {
      %c0_29 = arith.constant 0 : index
      %c0_30 = arith.constant 0 : index
      %59 = vector.load %arg8[%c0_29, %c0_30] : memref<128x128xf32, #tpu.memory_space<vmem>>, vector<128x128xf32>
      %c0_31 = arith.constant 0 : index
      %c0_32 = arith.constant 0 : index
      %60 = vector.load %arg6[%c0_31, %c0_32] : memref<1x128xf32, #tpu.memory_space<vmem>>, vector<1x128xf32>
      %61 = vector.broadcast %60 : vector<1x128xf32> to vector<128x128xf32>
      %62 = arith.addf %59, %61 : vector<128x128xf32>
      %63 = arith.addf %62, %3 : vector<128x128xf32>
      %c0_33 = arith.constant 0 : index
      %c0_34 = arith.constant 0 : index
      %64 = vector.load %arg7[%c0_33, %c0_34] : memref<128x128xf32, #tpu.memory_space<vmem>>, vector<128x128xf32>
      tpu.vector_store %arg7[%c0_33, %c0_34], %63 {strides = array<i32>} : memref<128x128xf32, #tpu.memory_space<vmem>>, vector<128x128xf32>,
    } else {
    }
    return
  }
  func.func @transform_0(%arg0: i32, %arg1: i32) -> (i32, i32) {
    %c0_i32 = arith.constant 0 : i32
    %c0_i32_0 = arith.constant 0 : i32
    return %arg0, %c0_i32 : i32, i32
  }
  func.func @transform_1(%arg0: i32, %arg1: i32) -> (i32, i32) {
    %c0_i32 = arith.constant 0 : i32
    %c0_i32_0 = arith.constant 0 : i32
    return %c0_i32, %arg1 : i32, i32
  }
  func.func @transform_2(%arg0: i32, %arg1: i32) -> (i32, i32) {
    %c0_i32 = arith.constant 0 : i32
    %c0_i32_0 = arith.constant 0 : i32
    return %c0_i32, %arg1 : i32, i32
  }
  func.func @transform_3(%arg0: i32, %arg1: i32) -> (i32, i32) {
    %c0_i32 = arith.constant 0 : i32
    %c0_i32_0 = arith.constant 0 : i32
    return %arg1, %c0_i32 : i32, i32
  }
  func.func @transform_4(%arg0: i32, %arg1: i32) -> (i32, i32) {
    %c0_i32 = arith.constant 0 : i32
    %c0_i32_0 = arith.constant 0 : i32
    %c0_i32_1 = arith.constant 0 : i32
    return %c0_i32, %c0_i32_0 : i32, i32
  }
  func.func @transform_5(%arg0: i32, %arg1: i32) -> (i32, i32) {
    %c0_i32 = arith.constant 0 : i32
    %c0_i32_0 = arith.constant 0 : i32
    return %arg0, %c0_i32 : i32, i32
  }
}

</mosaic_0001>

<llo_original>
// kernel: tpu_custom_call.1
$region0: #{tpu_custom_call.1}
  #allocation0 [shape = 'u32[]', space=smem, size = 0x4, offset = 0x4, fixed_abs, tag = 'smem constant byte address 0x4 - core index']
  #allocation1 [shape = 'u32[72,128]{1,0:T(1,128)}', space=vmem, size = 0x9000, scoped, tag = 'internal scratch']
  #allocation2 [shape = 'f32[128,128]{1,0:T(8,128)}', space=vmem, size = 0x10000, scoped, tag = 'scratch operand']
  %s0 = inlined_call_operand.hbm [shape: f32[512,128], index: 0, kind: input, shape index: {}]
  %s1 = inlined_call_operand.hbm [shape: bf16[128,512], index: 1, kind: input, shape index: {}]
  %s2 = inlined_call_operand.hbm [shape: f32[1,512], index: 2, kind: input, shape index: {}]
  %s3 = inlined_call_operand.hbm [shape: bf16[512,128], index: 3, kind: input, shape index: {}]
  %s4 = inlined_call_operand.vmem [shape: f32[1,128], index: 4, kind: input, shape index: {}]
  %s5 = inlined_call_operand.hbm [shape: f32[512,128], index: 5, kind: output, shape index: {}]
  %s6 = sld [smem:[#allocation0]]
  $region77: #{tpu_custom_call.1} parent=0
    _
  %s8 = ssub.s32 1, %s6
  %s9 = scalar_select 0, %s8, %s6
  $region1: #{tpu_custom_call.1} parent=0
    #allocation3 [shape = 'u8[131072]{0}', space=vmem, size = 0x20000, scoped, tag = 'input window, operand 0']
    #allocation4 [shape = 's32[2]{0}', space=sflag, size = 0x8, scoped, tag = 'scoped memory for tpu_custom_call.1']
    #allocation5 [shape = 's32[2]{0}', space=sflag, size = 0x8, scoped, tag = 'scoped memory for tpu_custom_call.1']
    #allocation6 [shape = 'u8[131072]{0}', space=vmem, size = 0x20000, scoped, tag = 'input window, operand 1']
    #allocation7 [shape = 's32[2]{0}', space=sflag, size = 0x8, scoped, tag = 'scoped memory for tpu_custom_call.1']
    #allocation8 [shape = 'u8[2048]{0}', space=vmem, size = 0x800, scoped, tag = 'input window, operand 2']
    #allocation9 [shape = 'u8[131072]{0}', space=vmem, size = 0x20000, scoped, tag = 'input window, operand 3']
    #allocation10 [shape = 's32[2]{0}', space=sflag, size = 0x8, scoped, tag = 'scoped memory for tpu_custom_call.1']
    #allocation11 [shape = 'u8[131072]{0}', space=vmem, size = 0x20000, scoped, tag = 'output window, operand 0']
    %10 = vsyncpa [#allocation4], 0
    %s11 = scalar_lea.sflag [#allocation4], 1
    %12 = vsyncpa %s11, 0
    %13 = vsyncpa [#allocation7], 0
    %s14 = scalar_lea.sflag [#allocation7], 1
    %15 = vsyncpa %s14, 0
    %16 = vsyncpa [#allocation10], 0
    %s17 = scalar_lea.sflag [#allocation10], 1
    %18 = vsyncpa %s17, 0
    %19 = vsyncpa [#allocation5], 0
    %s20 = scalar_lea.sflag [#allocation5], 1
    %21 = vsyncpa %s20, 0
    loop: start=0, step=1, limit=10
    $region2: #{tpu_custom_call.1} parent=1 // loop_pre_header
      _
    $region3: #{tpu_custom_call.1} parent=1 // loop_header
      %s23 = sphi 0, %s27
      %p24 = scmp.ge.s32.totalorder %s23, 10
      %s30 = sphi 0, %s42
      %s31 = sphi 0, %s38
      %s32 = sphi 0, %s30
      %s33 = sphi 0, %s31
      %s34 = sphi 0, %s32
      %s35 = sphi 0, %s33
      %s45 = sphi 0, %s47
      %s48 = sphi 0, %s45
      %s49 = sphi 0, %s48
      %s65 = sphi 0, %s49
      %s71 = sphi 0, %s73
      %s74 = sphi 0, %s71
      %s75 = sphi 0, %s74
      %s91 = sphi 0, %s75
      %s97 = sphi 0, %s99
      %s100 = sphi 0, %s97
      %s101 = sphi 0, %s100
      %s117 = sphi 0, %s101
      %s123 = sphi 0, %s125
      %s126 = sphi 0, %s123
      %s127 = sphi 0, %s126
      %s143 = sphi 0, %s127
      %s147 = sphi 0, %s147
      %s149 = sphi 0, %s147
      %s150 = sphi 0, %s149
      %s164 = sphi 0, %s150
      %s170 = sphi 0, %s172
      %s173 = sphi 0, %s170
      %s174 = sphi 0, %s173
      %s190 = sphi 0, %s174
    $region4: #{tpu_custom_call.1} parent=1 // loop_header_branch
      %26 = sbr.rel (%p24) target = $region8
    $region5: #{tpu_custom_call.1} parent=1 // loop_body
      %s28 = ssub.s32 %s23, 1
      %s29 = ssub.s32 %s23, 2
      %s36 = sadd.s32 1, %s31
      %p37 = scmp.ge.s32.totalorder %s36, 2
      %s38 = scalar_select %p37, 0, %s36
      %s39 = sadd.s32 1, %s30
      %s40 = scalar_select %p37, %s39, %s30
      %p41 = scmp.ge.s32.totalorder %s40, 4
      %s42 = scalar_select %p41, 0, %s40
      %s43 = ssub.s32 %s30, %s42
      %p44 = scmp.eq.s32.totalorder %s43, 0
      %s46 = sadd.s32 %s45, 1
      %s47 = scalar_select %p44, %s45, %s46
      %p50 = pneg %p44
      %p51 = scmp.eq.s32.totalorder %s23, 7
      %p52 = por %p50, %p51
      %p53 = scmp.ne.s32.totalorder %s45, %s48
      %p54 = scmp.eq.s32.totalorder %s23, 0
      %p55 = por %p53, %p54
      %p56 = scmp.ne.s32.totalorder %s45, %s48
      %p57 = scmp.eq.s32.totalorder %s28, 7
      %p58 = por %p56, %p57
      %p59 = scmp.ne.s32.totalorder %s48, %s49
      %p60 = scmp.eq.s32.totalorder %s28, 0
      %p61 = por %p59, %p60
      %p62 = scmp.ne.s32.totalorder %s48, %s49
      %p63 = scmp.eq.s32.totalorder %s29, 7
      %p64 = por %p62, %p63
      %p66 = scmp.ne.s32.totalorder %s49, %s65
      %p67 = scmp.eq.s32.totalorder %s29, 0
      %p68 = por %p66, %p67
      %s69 = ssub.s32 %s31, %s38
      %p70 = scmp.eq.s32.totalorder %s69, 0
      %s72 = sadd.s32 %s71, 1
      %s73 = scalar_select %p70, %s71, %s72
      %p76 = pneg %p70
      %p77 = scmp.eq.s32.totalorder %s23, 7
      %p78 = por %p76, %p77
      %p79 = scmp.ne.s32.totalorder %s71, %s74
      %p80 = scmp.eq.s32.totalorder %s23, 0
      %p81 = por %p79, %p80
      %p82 = scmp.ne.s32.totalorder %s71, %s74
      %p83 = scmp.eq.s32.totalorder %s28, 7
      %p84 = por %p82, %p83
      %p85 = scmp.ne.s32.totalorder %s74, %s75
      %p86 = scmp.eq.s32.totalorder %s28, 0
      %p87 = por %p85, %p86
      %p88 = scmp.ne.s32.totalorder %s74, %s75
      %p89 = scmp.eq.s32.totalorder %s29, 7
      %p90 = por %p88, %p89
      %p92 = scmp.ne.s32.totalorder %s75, %s91
      %p93 = scmp.eq.s32.totalorder %s29, 0
      %p94 = por %p92, %p93
      %s95 = ssub.s32 %s31, %s38
      %p96 = scmp.eq.s32.totalorder %s95, 0
      %s98 = sadd.s32 %s97, 1
      %s99 = scalar_select %p96, %s97, %s98
      %p102 = pneg %p96
      %p103 = scmp.eq.s32.totalorder %s23, 7
      %p104 = por %p102, %p103
      %p105 = scmp.ne.s32.totalorder %s97, %s100
      %p106 = scmp.eq.s32.totalorder %s23, 0
      %p107 = por %p105, %p106
      %p108 = scmp.ne.s32.totalorder %s97, %s100
      %p109 = scmp.eq.s32.totalorder %s28, 7
      %p110 = por %p108, %p109
      %p111 = scmp.ne.s32.totalorder %s100, %s101
      %p112 = scmp.eq.s32.totalorder %s28, 0
      %p113 = por %p111, %p112
      %p114 = scmp.ne.s32.totalorder %s100, %s101
      %p115 = scmp.eq.s32.totalorder %s29, 7
      %p116 = por %p114, %p115
      %p118 = scmp.ne.s32.totalorder %s101, %s117
      %p119 = scmp.eq.s32.totalorder %s29, 0
      %p120 = por %p118, %p119
      %s121 = ssub.s32 %s31, %s38
      %p122 = scmp.eq.s32.totalorder %s121, 0
      %s124 = sadd.s32 %s123, 1
      %s125 = scalar_select %p122, %s123, %s124
      %p128 = pneg %p122
      %p129 = scmp.eq.s32.totalorder %s23, 7
      %p130 = por %p128, %p129
      %p131 = scmp.ne.s32.totalorder %s123, %s126
      %p132 = scmp.eq.s32.totalorder %s23, 0
      %p133 = por %p131, %p132
      %p134 = scmp.ne.s32.totalorder %s123, %s126
      %p135 = scmp.eq.s32.totalorder %s28, 7
      %p136 = por %p134, %p135
      %p137 = scmp.ne.s32.totalorder %s126, %s127
      %p138 = scmp.eq.s32.totalorder %s28, 0
      %p139 = por %p137, %p138
      %p140 = scmp.ne.s32.totalorder %s126, %s127
      %p141 = scmp.eq.s32.totalorder %s29, 7
      %p142 = por %p140, %p141
      %p144 = scmp.ne.s32.totalorder %s127, %s143
      %p145 = scmp.eq.s32.totalorder %s29, 0
      %p146 = por %p144, %p145
      %s148 = sadd.s32 %s147, 1
      %p151 = scmp.eq.s32.totalorder %s23, 7
      %p152 = scmp.ne.s32.totalorder %s147, %s149
      %p153 = scmp.eq.s32.totalorder %s23, 0
      %p154 = por %p152, %p153
      %p155 = scmp.ne.s32.totalorder %s147, %s149
      %p156 = scmp.eq.s32.totalorder %s28, 7
      %p157 = por %p155, %p156
      %p158 = scmp.ne.s32.totalorder %s149, %s150
      %p159 = scmp.eq.s32.totalorder %s28, 0
      %p160 = por %p158, %p159
      %p161 = scmp.ne.s32.totalorder %s149, %s150
      %p162 = scmp.eq.s32.totalorder %s29, 7
      %p163 = por %p161, %p162
      %p165 = scmp.ne.s32.totalorder %s150, %s164
      %p166 = scmp.eq.s32.totalorder %s29, 0
      %p167 = por %p165, %p166
      %s168 = ssub.s32 %s30, %s42
      %p169 = scmp.eq.s32.totalorder %s168, 0
      %s171 = sadd.s32 %s170, 1
      %s172 = scalar_select %p169, %s170, %s171
      %p175 = pneg %p169
      %p176 = scmp.eq.s32.totalorder %s23, 7
      %p177 = por %p175, %p176
      %p178 = scmp.ne.s32.totalorder %s170, %s173
      %p179 = scmp.eq.s32.totalorder %s23, 0
      %p180 = por %p178, %p179
      %p181 = scmp.ne.s32.totalorder %s170, %s173
      %p182 = scmp.eq.s32.totalorder %s28, 7
      %p183 = por %p181, %p182
      %p184 = scmp.ne.s32.totalorder %s173, %s174
      %p185 = scmp.eq.s32.totalorder %s28, 0
      %p186 = por %p184, %p185
      %p187 = scmp.ne.s32.totalorder %s173, %s174
      %p188 = scmp.eq.s32.totalorder %s29, 7
      %p189 = por %p187, %p188
      %p191 = scmp.ne.s32.totalorder %s174, %s190
      %p192 = scmp.eq.s32.totalorder %s29, 0
      %p193 = por %p191, %p192
      %p194 = scmp.le.s32.totalorder 1, %s23
      %p195 = scmp.lt.s32.totalorder %s23, 9
      %p196 = pnand %p194, %p195
      %p197 = pneg %p196
      // Predicated region
      $region9: #{tpu_custom_call.1} parent=5 // pred_check
        _
      $region10: #{tpu_custom_call.1} parent=5 // pred_check_branch
        %199 = sbr.rel (%p196) target = $region12
      $region11: #{tpu_custom_call.1} parent=5 // pred_region
        %s200 = ssub.s32 %s23, 1
        // Predicated region
        $region13: #{tpu_custom_call.1} parent=11 // pred_check
          %p201 = pneg %p160
        $region14: #{tpu_custom_call.1} parent=11 // pred_check_branch
          %203 = sbr.rel (%p201) target = $region16
        $region15: #{tpu_custom_call.1} parent=11 // pred_region
          _
        $region16: #{tpu_custom_call.1} parent=11 // pred_fallthru
          _
      $region12: #{tpu_custom_call.1} parent=5 // pred_fallthru
        _
      %p204 = scmp.lt.s32.totalorder %s23, 8
      // Predicated region
      $region17: #{tpu_custom_call.1} parent=5 // pred_check
        %p205 = pneg %p204
      $region18: #{tpu_custom_call.1} parent=5 // pred_check_branch
        %207 = sbr.rel (%p205) target = $region20
      $region19: #{tpu_custom_call.1} parent=5 // pred_region
        // Predicated region
        $region21: #{tpu_custom_call.1} parent=19 // pred_check
          %p208 = pneg %p55
        $region22: #{tpu_custom_call.1} parent=19 // pred_check_branch
          %210 = sbr.rel (%p208) target = $region24
        $region23: #{tpu_custom_call.1} parent=19 // pred_region
          %s211 = sand.u32 %s45, 1
          %s212 = scalar_lea.sflag [#allocation4], %s211
          %s213 = sand.u32 %s45, 1
          %s214 = smul.addr %s213, 128
          %s215 = scalar_lea.vmem [#allocation3], %s214
          %s216 = smul.u32 16, %s30
          %218 = vsyncadd %s212, 0
          %s219 = smul.addr %s216, 8
          %s220 = scalar_lea.hbm %s0, %s219
          %s221 = sshll.u32 %s220, 4
          %s222 = int_to_ptr.hbm [resolvable:$true] %s221
          %s223 = sshll.u32 %s215, 4
          %s224 = int_to_ptr.vmem [resolvable:$true] %s223
          %229 = dma.hbm_to_vmem [thread:$0]  %s222, 2048, %s224, %s212, 128, 128, 8
        $region24: #{tpu_custom_call.1} parent=19 // pred_fallthru
          _
        // Predicated region
        $region25: #{tpu_custom_call.1} parent=19 // pred_check
          %p230 = pneg %p81
        $region26: #{tpu_custom_call.1} parent=19 // pred_check_branch
          %232 = sbr.rel (%p230) target = $region28
        $region27: #{tpu_custom_call.1} parent=19 // pred_region
          %s233 = sand.u32 %s23, 1
          %s234 = scalar_lea.sflag [#allocation7], %s233
          %s235 = sand.u32 %s71, 1
          %s236 = smul.addr %s235, 128
          %s237 = scalar_lea.vmem [#allocation6], %s236
          %s238 = smul.u32 2, %s31
          %240 = vsyncadd %s234, 0
          %s241 = smul.addr %s238, 4
          %s242 = scalar_lea.hbm %s1, %s241
          %s243 = sshll.u32 %s242, 4
          %s244 = int_to_ptr.hbm [resolvable:$true] %s243
          %s245 = sshll.u32 %s237, 4
          %s246 = int_to_ptr.vmem [resolvable:$true] %s245
          %251 = dma.hbm_to_vmem [thread:$0]  %s244, 2048, %s246, %s234, 256, 128, 8
        $region28: #{tpu_custom_call.1} parent=19 // pred_fallthru
          _
        // Predicated region
        $region29: #{tpu_custom_call.1} parent=19 // pred_check
          %p252 = pneg %p107
        $region30: #{tpu_custom_call.1} parent=19 // pred_check_branch
          %254 = sbr.rel (%p252) target = $region32
        $region31: #{tpu_custom_call.1} parent=19 // pred_region
          %s255 = sand.u32 %s23, 1
          %s256 = scalar_lea.sflag [#allocation7], %s255
          %s257 = sand.u32 %s97, 1
          %s258 = smul.addr %s257, 2
          %s259 = scalar_lea.vmem [#allocation8], %s258
          %s260 = smul.u32 2, %s31
          %262 = vsyncadd %s256, 0
          %s263 = scalar_lea.hbm %s2, %s260
          %s265 = sshll.u32 %s263, 4
          %s266 = int_to_ptr.hbm [resolvable:$true] %s265
          %s267 = sshll.u32 %s259, 4
          %s268 = int_to_ptr.vmem [resolvable:$true] %s267
          %270 = dma.hbm_to_vmem [thread:$0]  %s266, 32, %s268, %s256
        $region32: #{tpu_custom_call.1} parent=19 // pred_fallthru
          _
        // Predicated region
        $region33: #{tpu_custom_call.1} parent=19 // pred_check
          %p271 = pneg %p133
        $region34: #{tpu_custom_call.1} parent=19 // pred_check_branch
          %273 = sbr.rel (%p271) target = $region36
        $region35: #{tpu_custom_call.1} parent=19 // pred_region
          %s274 = sand.u32 %s123, 1
          %s275 = scalar_lea.sflag [#allocation10], %s274
          %s276 = sand.u32 %s123, 1
          %s277 = smul.addr %s276, 128
          %s278 = scalar_lea.vmem [#allocation9], %s277
          %s279 = smul.u32 32, %s31
          %281 = vsyncadd %s275, 0
          %s282 = smul.addr %s279, 4
          %s283 = scalar_lea.hbm %s3, %s282
          %s284 = sshll.u32 %s283, 4
          %s285 = int_to_ptr.hbm [resolvable:$true] %s284
          %s286 = sshll.u32 %s278, 4
          %s287 = int_to_ptr.vmem [resolvable:$true] %s286
          %292 = dma.hbm_to_vmem [thread:$0]  %s285, 2048, %s287, %s275, 64, 64, 4
        $region36: #{tpu_custom_call.1} parent=19 // pred_fallthru
          _
      $region20: #{tpu_custom_call.1} parent=5 // pred_fallthru
        _
      %p293 = scmp.le.s32.totalorder 1, %s23
      %p294 = scmp.lt.s32.totalorder %s23, 9
      %p295 = pnand %p293, %p294
      %p296 = pneg %p295
      // Predicated region
      $region37: #{tpu_custom_call.1} parent=5 // pred_check
        _
      $region38: #{tpu_custom_call.1} parent=5 // pred_check_branch
        %298 = sbr.rel (%p295) target = $region40
      $region39: #{tpu_custom_call.1} parent=5 // pred_region
        %s299 = ssub.s32 %s23, 1
        %s300 = sand.u32 %s48, 1
        %s301 = scalar_lea.sflag [#allocation4], %s300
        %s302 = sand.u32 %s48, 1
        %s303 = smul.addr %s302, 128
        %s304 = scalar_lea.vmem [#allocation3], %s303
        // Predicated region
        $region41: #{tpu_custom_call.1} parent=39 // pred_check
          %p305 = pneg %p61
        $region42: #{tpu_custom_call.1} parent=39 // pred_check_branch
          %307 = sbr.rel (%p305) target = $region44
        $region43: #{tpu_custom_call.1} parent=39 // pred_region
          %309 = dma.done %s301, 2048
        $region44: #{tpu_custom_call.1} parent=39 // pred_fallthru
          _
        %s310 = sand.u32 %s28, 1
        %s311 = scalar_lea.sflag [#allocation7], %s310
        %s312 = sand.u32 %s74, 1
        %s313 = smul.addr %s312, 128
        %s314 = scalar_lea.vmem [#allocation6], %s313
        // Predicated region
        $region45: #{tpu_custom_call.1} parent=39 // pred_check
          %p315 = pneg %p87
        $region46: #{tpu_custom_call.1} parent=39 // pred_check_branch
          %317 = sbr.rel (%p315) target = $region48
        $region47: #{tpu_custom_call.1} parent=39 // pred_region
          %319 = dma.done %s311, 2048
        $region48: #{tpu_custom_call.1} parent=39 // pred_fallthru
          _
        %s320 = sand.u32 %s28, 1
        %s321 = scalar_lea.sflag [#allocation7], %s320
        %s322 = sand.u32 %s100, 1
        %s323 = smul.addr %s322, 2
        %s324 = scalar_lea.vmem [#allocation8], %s323
        // Predicated region
        $region49: #{tpu_custom_call.1} parent=39 // pred_check
          %p325 = pneg %p113
        $region50: #{tpu_custom_call.1} parent=39 // pred_check_branch
          %327 = sbr.rel (%p325) target = $region52
        $region51: #{tpu_custom_call.1} parent=39 // pred_region
          %329 = dma.done %s321, 32
        $region52: #{tpu_custom_call.1} parent=39 // pred_fallthru
          _
        %s330 = sand.u32 %s126, 1
        %s331 = scalar_lea.sflag [#allocation10], %s330
        %s332 = sand.u32 %s126, 1
        %s333 = smul.addr %s332, 128
        %s334 = scalar_lea.vmem [#allocation9], %s333
        // Predicated region
        $region53: #{tpu_custom_call.1} parent=39 // pred_check
          %p335 = pneg %p139
        $region54: #{tpu_custom_call.1} parent=39 // pred_check_branch
          %337 = sbr.rel (%p335) target = $region56
        $region55: #{tpu_custom_call.1} parent=39 // pred_region
          %339 = dma.done %s331, 2048
        $region56: #{tpu_custom_call.1} parent=39 // pred_fallthru
          _
        %s340 = sand.u32 %s48, 1
        %s341 = scalar_lea.sflag [#allocation4], %s340
        %s342 = sand.u32 %s48, 1
        %s343 = smul.addr %s342, 128
        %s344 = scalar_lea.vmem [#allocation3], %s343
        %p345 = pneg %p61
        %p346 = pneg %p58
        %s347 = sand.u32 %s28, 1
        %s348 = scalar_lea.sflag [#allocation7], %s347
        %s349 = sand.u32 %s74, 1
        %s350 = smul.addr %s349, 128
        %s351 = scalar_lea.vmem [#allocation6], %s350
        %p352 = pneg %p87
        %p353 = pneg %p84
        %s354 = sand.u32 %s28, 1
        %s355 = scalar_lea.sflag [#allocation7], %s354
        %s356 = sand.u32 %s100, 1
        %s357 = smul.addr %s356, 2
        %s358 = scalar_lea.vmem [#allocation8], %s357
        %p359 = pneg %p113
        %p360 = pneg %p110
        %s361 = sand.u32 %s126, 1
        %s362 = scalar_lea.sflag [#allocation10], %s361
        %s363 = sand.u32 %s126, 1
        %s364 = smul.addr %s363, 128
        %s365 = scalar_lea.vmem [#allocation9], %s364
        %p366 = pneg %p139
        %p367 = pneg %p136
        %p368 = pneg %p160
        %p369 = pneg %p157
        %p370 = pneg %p186
        %p371 = pneg %p183
        %s372 = sand.u32 %s173, 1
        %s373 = scalar_lea.sflag [#allocation5], %s372
        %s374 = sand.u32 %s173, 1
        %s375 = smul.addr %s374, 128
        %s376 = scalar_lea.vmem [#allocation11], %s375
        %s377 = smul.u32 16, %s32
        %s378 = smul.u32 2, %s33
        %s379 = smul.u32 2, %s33
        %s380 = smul.u32 32, %s33
        %s381 = smul.u32 16, %s32
        %p382 = scmp.eq.s32.totalorder %s33, 0
        // Predicated region
        $region57: #{tpu_custom_call.1} parent=39 // pred_check
          %p383 = pneg %p382
        $region58: #{tpu_custom_call.1} parent=39 // pred_check_branch
          %385 = sbr.rel (%p383) target = $region60
        $region59: #{tpu_custom_call.1} parent=39 // pred_region
          %386 = vst [vmem:[#allocation2] sm:$0xff] 0.0
          %387 = vst [vmem:[#allocation2 + $0x8] sm:$0xff] 0.0
          %388 = vst [vmem:[#allocation2 + $0x10] sm:$0xff] 0.0
          %389 = vst [vmem:[#allocation2 + $0x18] sm:$0xff] 0.0
          %390 = vst [vmem:[#allocation2 + $0x20] sm:$0xff] 0.0
          %391 = vst [vmem:[#allocation2 + $0x28] sm:$0xff] 0.0
          %392 = vst [vmem:[#allocation2 + $0x30] sm:$0xff] 0.0
          %393 = vst [vmem:[#allocation2 + $0x38] sm:$0xff] 0.0
          %394 = vst [vmem:[#allocation2 + $0x40] sm:$0xff] 0.0
          %395 = vst [vmem:[#allocation2 + $0x48] sm:$0xff] 0.0
          %396 = vst [vmem:[#allocation2 + $0x50] sm:$0xff] 0.0
          %397 = vst [vmem:[#allocation2 + $0x58] sm:$0xff] 0.0
          %398 = vst [vmem:[#allocation2 + $0x60] sm:$0xff] 0.0
          %399 = vst [vmem:[#allocation2 + $0x68] sm:$0xff] 0.0
          %400 = vst [vmem:[#allocation2 + $0x70] sm:$0xff] 0.0
          %401 = vst [vmem:[#allocation2 + $0x78] sm:$0xff] 0.0
        $region60: #{tpu_custom_call.1} parent=39 // pred_fallthru
          _
        %v402 = vld [vmem:[%s304] sm:$0xff]
        %v403 = vld [vmem:[%s304 + $0x8] sm:$0xff]
        %v404 = vld [vmem:[%s304 + $0x10] sm:$0xff]
        %v405 = vld [vmem:[%s304 + $0x18] sm:$0xff]
        %v406 = vld [vmem:[%s304 + $0x20] sm:$0xff]
        %v407 = vld [vmem:[%s304 + $0x28] sm:$0xff]
        %v408 = vld [vmem:[%s304 + $0x30] sm:$0xff]
        %v409 = vld [vmem:[%s304 + $0x38] sm:$0xff]
        %v410 = vld [vmem:[%s304 + $0x40] sm:$0xff]
        %v411 = vld [vmem:[%s304 + $0x48] sm:$0xff]
        %v412 = vld [vmem:[%s304 + $0x50] sm:$0xff]
        %v413 = vld [vmem:[%s304 + $0x58] sm:$0xff]
        %v414 = vld [vmem:[%s304 + $0x60] sm:$0xff]
        %v415 = vld [vmem:[%s304 + $0x68] sm:$0xff]
        %v416 = vld [vmem:[%s304 + $0x70] sm:$0xff]
        %v417 = vld [vmem:[%s304 + $0x78] sm:$0xff]
        %v418 = vpack.c.bf16 %v403, %v402
        %v419 = vpack.c.bf16 %v405, %v404
        %v420 = vpack.c.bf16 %v407, %v406
        %v421 = vpack.c.bf16 %v409, %v408
        %v422 = vpack.c.bf16 %v411, %v410
        %v423 = vpack.c.bf16 %v413, %v412
        %v424 = vpack.c.bf16 %v415, %v414
        %v425 = vpack.c.bf16 %v417, %v416
        %v426 = vld [vmem:[%s314] sm:$0xff]
        %v427 = vld [vmem:[%s314 + $0x8] sm:$0xff]
        %v428 = vld [vmem:[%s314 + $0x10] sm:$0xff]
        %v429 = vld [vmem:[%s314 + $0x18] sm:$0xff]
        %v430 = vld [vmem:[%s314 + $0x20] sm:$0xff]
        %v431 = vld [vmem:[%s314 + $0x28] sm:$0xff]
        %v432 = vld [vmem:[%s314 + $0x30] sm:$0xff]
        %v433 = vld [vmem:[%s314 + $0x38] sm:$0xff]
        %v434 = vld [vmem:[%s314 + $0x40] sm:$0xff]
        %v435 = vld [vmem:[%s314 + $0x48] sm:$0xff]
        %v436 = vld [vmem:[%s314 + $0x50] sm:$0xff]
        %v437 = vld [vmem:[%s314 + $0x58] sm:$0xff]
        %v438 = vld [vmem:[%s314 + $0x60] sm:$0xff]
        %v439 = vld [vmem:[%s314 + $0x68] sm:$0xff]
        %v440 = vld [vmem:[%s314 + $0x70] sm:$0xff]
        %v441 = vld [vmem:[%s314 + $0x78] sm:$0xff]
        %v442 = vld [vmem:[%s324] sm:$0x3]
        %v444 = vperm.slane %v442, 0
        %v445 = vperm.slane %v442, 1
        %v464 = vunpack.c.l.b16 %v426
        %v465 = vunpack.c.h.b16 %v426
        %v466 = vunpack.c.l.b16 %v427
        %v467 = vunpack.c.h.b16 %v427
        %v468 = vunpack.c.l.b16 %v428
        %v469 = vunpack.c.h.b16 %v428
        %v470 = vunpack.c.l.b16 %v429
        %v471 = vunpack.c.h.b16 %v429
        %v472 = vunpack.c.l.b16 %v430
        %v473 = vunpack.c.h.b16 %v430
        %v474 = vunpack.c.l.b16 %v431
        %v475 = vunpack.c.h.b16 %v431
        %v476 = vunpack.c.l.b16 %v432
        %v477 = vunpack.c.h.b16 %v432
        %v478 = vunpack.c.l.b16 %v433
        %v479 = vunpack.c.h.b16 %v433
        %v480 = vunpack.c.l.b16 %v434
        %v481 = vunpack.c.h.b16 %v434
        %v482 = vunpack.c.l.b16 %v435
        %v483 = vunpack.c.h.b16 %v435
        %v484 = vunpack.c.l.b16 %v436
        %v485 = vunpack.c.h.b16 %v436
        %v486 = vunpack.c.l.b16 %v437
        %v487 = vunpack.c.h.b16 %v437
        %v488 = vunpack.c.l.b16 %v438
        %v489 = vunpack.c.h.b16 %v438
        %v490 = vunpack.c.l.b16 %v439
        %v491 = vunpack.c.h.b16 %v439
        %v492 = vunpack.c.l.b16 %v440
        %v493 = vunpack.c.h.b16 %v440
        %v494 = vunpack.c.l.b16 %v441
        %v495 = vunpack.c.h.b16 %v441
        %v496 = vpack.c.b16 %v466, %v464
        %v497 = vpack.c.b16 %v467, %v465
        %v498 = vpack.c.b16 %v470, %v468
        %v499 = vpack.c.b16 %v471, %v469
        %v500 = vpack.c.b16 %v474, %v472
        %v501 = vpack.c.b16 %v475, %v473
        %v502 = vpack.c.b16 %v478, %v476
        %v503 = vpack.c.b16 %v479, %v477
        %v504 = vpack.c.b16 %v482, %v480
        %v505 = vpack.c.b16 %v483, %v481
        %v506 = vpack.c.b16 %v486, %v484
        %v507 = vpack.c.b16 %v487, %v485
        %v508 = vpack.c.b16 %v490, %v488
        %v509 = vpack.c.b16 %v491, %v489
        %v510 = vpack.c.b16 %v494, %v492
        %v511 = vpack.c.b16 %v495, %v493
        %528 = vmatpush.bf16.msra.mxu0 %v510
        %529 = vmatpush.bf16.msra.mxu0 %v508
        %530 = vmatpush.bf16.msra.mxu0 %v506
        %531 = vmatpush.bf16.msra.mxu0 %v504
        %532 = vmatpush.bf16.msra.mxu0 %v502
        %533 = vmatpush.bf16.msra.mxu0 %v500
        %534 = vmatpush.bf16.msra.mxu0 %v498
        %535 = vmatpush.bf16.msra.mxu0 %v496
        %536 = vmatmul.bf16.gmra.mxu0 %v418
        %v537 = vpop.f32.mrf.mxu0
        %v538 = vadd.f32 %v444, %v537
        %v539 = vpop.f32.mrf.mxu0
        %v540 = vadd.f32 %v444, %v539
        %541 = vmatmul.bf16.gmra.mxu0 %v419
        %v542 = vpop.f32.mrf.mxu0
        %v543 = vadd.f32 %v444, %v542
        %v544 = vpop.f32.mrf.mxu0
        %v545 = vadd.f32 %v444, %v544
        %546 = vmatmul.bf16.gmra.mxu0 %v420
        %v547 = vpop.f32.mrf.mxu0
        %v548 = vadd.f32 %v444, %v547
        %v549 = vpop.f32.mrf.mxu0
        %v550 = vadd.f32 %v444, %v549
        %551 = vmatmul.bf16.gmra.mxu0 %v421
        %v552 = vpop.f32.mrf.mxu0
        %v553 = vadd.f32 %v444, %v552
        %v554 = vpop.f32.mrf.mxu0
        %v555 = vadd.f32 %v444, %v554
        %556 = vmatmul.bf16.gmra.mxu0 %v422
        %v557 = vpop.f32.mrf.mxu0
        %v558 = vadd.f32 %v444, %v557
        %v559 = vpop.f32.mrf.mxu0
        %v560 = vadd.f32 %v444, %v559
        %561 = vmatmul.bf16.gmra.mxu0 %v423
        %v562 = vpop.f32.mrf.mxu0
        %v563 = vadd.f32 %v444, %v562
        %v564 = vpop.f32.mrf.mxu0
        %v565 = vadd.f32 %v444, %v564
        %566 = vmatmul.bf16.gmra.mxu0 %v424
        %v567 = vpop.f32.mrf.mxu0
        %v568 = vadd.f32 %v444, %v567
        %v569 = vpop.f32.mrf.mxu0
        %v570 = vadd.f32 %v444, %v569
        %571 = vmatmul.bf16.gmra.mxu0 %v425
        %v572 = vpop.f32.mrf.mxu0
        %v573 = vadd.f32 %v444, %v572
        %v574 = vpop.f32.mrf.mxu0
        %v575 = vadd.f32 %v444, %v574
        %576 = vdwg.mxu0
        %577 = vmatpush.bf16.msra.mxu0 %v511
        %578 = vmatpush.bf16.msra.mxu0 %v509
        %579 = vmatpush.bf16.msra.mxu0 %v507
        %580 = vmatpush.bf16.msra.mxu0 %v505
        %581 = vmatpush.bf16.msra.mxu0 %v503
        %582 = vmatpush.bf16.msra.mxu0 %v501
        %583 = vmatpush.bf16.msra.mxu0 %v499
        %584 = vmatpush.bf16.msra.mxu0 %v497
        %585 = vmatmul.bf16.gmra.mxu0 %v418
        %v586 = vpop.f32.mrf.mxu0
        %v587 = vadd.f32 %v445, %v586
        %v588 = vpop.f32.mrf.mxu0
        %v589 = vadd.f32 %v445, %v588
        %590 = vmatmul.bf16.gmra.mxu0 %v419
        %v591 = vpop.f32.mrf.mxu0
        %v592 = vadd.f32 %v445, %v591
        %v593 = vpop.f32.mrf.mxu0
        %v594 = vadd.f32 %v445, %v593
        %595 = vmatmul.bf16.gmra.mxu0 %v420
        %v596 = vpop.f32.mrf.mxu0
        %v597 = vadd.f32 %v445, %v596
        %v598 = vpop.f32.mrf.mxu0
        %v599 = vadd.f32 %v445, %v598
        %600 = vmatmul.bf16.gmra.mxu0 %v421
        %v601 = vpop.f32.mrf.mxu0
        %v602 = vadd.f32 %v445, %v601
        %v603 = vpop.f32.mrf.mxu0
        %v604 = vadd.f32 %v445, %v603
        %605 = vmatmul.bf16.gmra.mxu0 %v422
        %v606 = vpop.f32.mrf.mxu0
        %v607 = vadd.f32 %v445, %v606
        %v608 = vpop.f32.mrf.mxu0
        %v609 = vadd.f32 %v445, %v608
        %610 = vmatmul.bf16.gmra.mxu0 %v423
        %v611 = vpop.f32.mrf.mxu0
        %v612 = vadd.f32 %v445, %v611
        %v613 = vpop.f32.mrf.mxu0
        %v614 = vadd.f32 %v445, %v613
        %615 = vmatmul.bf16.gmra.mxu0 %v424
        %v616 = vpop.f32.mrf.mxu0
        %v617 = vadd.f32 %v445, %v616
        %v618 = vpop.f32.mrf.mxu0
        %v619 = vadd.f32 %v445, %v618
        %620 = vmatmul.bf16.gmra.mxu0 %v425
        %v621 = vpop.f32.mrf.mxu0
        %v622 = vadd.f32 %v445, %v621
        %v623 = vpop.f32.mrf.mxu0
        %v624 = vadd.f32 %v445, %v623
        %625 = vdwg.mxu0
        %v626 = vmul.f32 %v538, 0.70710677
        %v627 = vmul.f32 %v587, 0.70710677
        %v628 = vmul.f32 %v540, 0.70710677
        %v629 = vmul.f32 %v589, 0.70710677
        %v630 = vmul.f32 %v543, 0.70710677
        %v631 = vmul.f32 %v592, 0.70710677
        %v632 = vmul.f32 %v545, 0.70710677
        %v633 = vmul.f32 %v594, 0.70710677
        %v634 = vmul.f32 %v548, 0.70710677
        %v635 = vmul.f32 %v597, 0.70710677
        %v636 = vmul.f32 %v550, 0.70710677
        %v637 = vmul.f32 %v599, 0.70710677
        %v638 = vmul.f32 %v553, 0.70710677
        %v639 = vmul.f32 %v602, 0.70710677
        %v640 = vmul.f32 %v555, 0.70710677
        %v641 = vmul.f32 %v604, 0.70710677
        %v642 = vmul.f32 %v558, 0.70710677
        %v643 = vmul.f32 %v607, 0.70710677
        %v644 = vmul.f32 %v560, 0.70710677
        %v645 = vmul.f32 %v609, 0.70710677
        %v646 = vmul.f32 %v563, 0.70710677
        %v647 = vmul.f32 %v612, 0.70710677
        %v648 = vmul.f32 %v565, 0.70710677
        %v649 = vmul.f32 %v614, 0.70710677
        %v650 = vmul.f32 %v568, 0.70710677
        %v651 = vmul.f32 %v617, 0.70710677
        %v652 = vmul.f32 %v570, 0.70710677
        %v653 = vmul.f32 %v619, 0.70710677
        %v654 = vmul.f32 %v573, 0.70710677
        %v655 = vmul.f32 %v622, 0.70710677
        %v656 = vmul.f32 %v575, 0.70710677
        %v657 = vmul.f32 %v624, 0.70710677
        %v658 = vand.u32 2147483647, %v626
        %v659 = vand.u32 2147483647, %v627
        %v660 = vand.u32 2147483647, %v628
        %v661 = vand.u32 2147483647, %v629
        %v662 = vand.u32 2147483647, %v630
        %v663 = vand.u32 2147483647, %v631
        %v664 = vand.u32 2147483647, %v632
        %v665 = vand.u32 2147483647, %v633
        %v666 = vand.u32 2147483647, %v634
        %v667 = vand.u32 2147483647, %v635
        %v668 = vand.u32 2147483647, %v636
        %v669 = vand.u32 2147483647, %v637
        %v670 = vand.u32 2147483647, %v638
        %v671 = vand.u32 2147483647, %v639
        %v672 = vand.u32 2147483647, %v640
        %v673 = vand.u32 2147483647, %v641
        %v674 = vand.u32 2147483647, %v642
        %v675 = vand.u32 2147483647, %v643
        %v676 = vand.u32 2147483647, %v644
        %v677 = vand.u32 2147483647, %v645
        %v678 = vand.u32 2147483647, %v646
        %v679 = vand.u32 2147483647, %v647
        %v680 = vand.u32 2147483647, %v648
        %v681 = vand.u32 2147483647, %v649
        %v682 = vand.u32 2147483647, %v650
        %v683 = vand.u32 2147483647, %v651
        %v684 = vand.u32 2147483647, %v652
        %v685 = vand.u32 2147483647, %v653
        %v686 = vand.u32 2147483647, %v654
        %v687 = vand.u32 2147483647, %v655
        %v688 = vand.u32 2147483647, %v656
        %v689 = vand.u32 2147483647, %v657
        %v690 = vmul.f32 %v658, 0.3275911
        %v691 = vmul.f32 %v659, 0.3275911
        %v692 = vmul.f32 %v660, 0.3275911
        %v693 = vmul.f32 %v661, 0.3275911
        %v694 = vmul.f32 %v662, 0.3275911
        %v695 = vmul.f32 %v663, 0.3275911
        %v696 = vmul.f32 %v664, 0.3275911
        %v697 = vmul.f32 %v665, 0.3275911
        %v698 = vmul.f32 %v666, 0.3275911
        %v699 = vmul.f32 %v667, 0.3275911
        %v700 = vmul.f32 %v668, 0.3275911
        %v701 = vmul.f32 %v669, 0.3275911
        %v702 = vmul.f32 %v670, 0.3275911
        %v703 = vmul.f32 %v671, 0.3275911
        %v704 = vmul.f32 %v672, 0.3275911
        %v705 = vmul.f32 %v673, 0.3275911
        %v706 = vmul.f32 %v674, 0.3275911
        %v707 = vmul.f32 %v675, 0.3275911
        %v708 = vmul.f32 %v676, 0.3275911
        %v709 = vmul.f32 %v677, 0.3275911
        %v710 = vmul.f32 %v678, 0.3275911
        %v711 = vmul.f32 %v679, 0.3275911
        %v712 = vmul.f32 %v680, 0.3275911
        %v713 = vmul.f32 %v681, 0.3275911
        %v714 = vmul.f32 %v682, 0.3275911
        %v715 = vmul.f32 %v683, 0.3275911
        %v716 = vmul.f32 %v684, 0.3275911
        %v717 = vmul.f32 %v685, 0.3275911
        %v718 = vmul.f32 %v686, 0.3275911
        %v719 = vmul.f32 %v687, 0.3275911
        %v720 = vmul.f32 %v688, 0.3275911
        %v721 = vmul.f32 %v689, 0.3275911
        %v722 = vadd.f32 %v690, 1.0
        %v723 = vadd.f32 %v691, 1.0
        %v724 = vadd.f32 %v692, 1.0
        %v725 = vadd.f32 %v693, 1.0
        %v726 = vadd.f32 %v694, 1.0
        %v727 = vadd.f32 %v695, 1.0
        %v728 = vadd.f32 %v696, 1.0
        %v729 = vadd.f32 %v697, 1.0
        %v730 = vadd.f32 %v698, 1.0
        %v731 = vadd.f32 %v699, 1.0
        %v732 = vadd.f32 %v700, 1.0
        %v733 = vadd.f32 %v701, 1.0
        %v734 = vadd.f32 %v702, 1.0
        %v735 = vadd.f32 %v703, 1.0
        %v736 = vadd.f32 %v704, 1.0
        %v737 = vadd.f32 %v705, 1.0
        %v738 = vadd.f32 %v706, 1.0
        %v739 = vadd.f32 %v707, 1.0
        %v740 = vadd.f32 %v708, 1.0
        %v741 = vadd.f32 %v709, 1.0
        %v742 = vadd.f32 %v710, 1.0
        %v743 = vadd.f32 %v711, 1.0
        %v744 = vadd.f32 %v712, 1.0
        %v745 = vadd.f32 %v713, 1.0
        %v746 = vadd.f32 %v714, 1.0
        %v747 = vadd.f32 %v715, 1.0
        %v748 = vadd.f32 %v716, 1.0
        %v749 = vadd.f32 %v717, 1.0
        %v750 = vadd.f32 %v718, 1.0
        %v751 = vadd.f32 %v719, 1.0
        %v752 = vadd.f32 %v720, 1.0
        %v753 = vadd.f32 %v721, 1.0
        %v754 = vrcp.pop %v722
        %v755 = vmul.f32 %v722, %v754
        %v756 = vsub.f32 1.0, %v755
        %v757 = vmul.f32 %v754, %v756
        %v758 = vadd.f32 %v754, %v757
        %vm759 = vweird.f32 %v722
        %vm760 = vweird.f32 %v754
        %vm761 = vmor %vm759, %vm760
        %v762 = vsel %vm761, %v754, %v758
        %v763 = vand.u32 2147483647, %v722
        %vm764 = vcmp.eq.f32.partialorder %v763, 8.507059e+37
        %v765 = vand.u32 %v722, 2147483648
        %v766 = vor.u32 1.1754944e-38, %v765
        %v767 = vsel %vm764, %v766, %v762
        %v768 = vmul.f32 1.0, %v767
        %v769 = vrcp.pop %v723
        %v770 = vmul.f32 %v723, %v769
        %v771 = vsub.f32 1.0, %v770
        %v772 = vmul.f32 %v769, %v771
        %v773 = vadd.f32 %v769, %v772
        %vm774 = vweird.f32 %v723
        %vm775 = vweird.f32 %v769
        %vm776 = vmor %vm774, %vm775
        %v777 = vsel %vm776, %v769, %v773
        %v778 = vand.u32 2147483647, %v723
        %vm779 = vcmp.eq.f32.partialorder %v778, 8.507059e+37
        %v780 = vand.u32 %v723, 2147483648
        %v781 = vor.u32 1.1754944e-38, %v780
        %v782 = vsel %vm779, %v781, %v777
        %v783 = vmul.f32 1.0, %v782
        %v784 = vrcp.pop %v724
        %v785 = vmul.f32 %v724, %v784
        %v786 = vsub.f32 1.0, %v785
        %v787 = vmul.f32 %v784, %v786
        %v788 = vadd.f32 %v784, %v787
        %vm789 = vweird.f32 %v724
        %vm790 = vweird.f32 %v784
        %vm791 = vmor %vm789, %vm790
        %v792 = vsel %vm791, %v784, %v788
        %v793 = vand.u32 2147483647, %v724
        %vm794 = vcmp.eq.f32.partialorder %v793, 8.507059e+37
        %v795 = vand.u32 %v724, 2147483648
        %v796 = vor.u32 1.1754944e-38, %v795
        %v797 = vsel %vm794, %v796, %v792
        %v798 = vmul.f32 1.0, %v797
        %v799 = vrcp.pop %v725
        %v800 = vmul.f32 %v725, %v799
        %v801 = vsub.f32 1.0, %v800
        %v802 = vmul.f32 %v799, %v801
        %v803 = vadd.f32 %v799, %v802
        %vm804 = vweird.f32 %v725
        %vm805 = vweird.f32 %v799
        %vm806 = vmor %vm804, %vm805
        %v807 = vsel %vm806, %v799, %v803
        %v808 = vand.u32 2147483647, %v725
        %vm809 = vcmp.eq.f32.partialorder %v808, 8.507059e+37
        %v810 = vand.u32 %v725, 2147483648
        %v811 = vor.u32 1.1754944e-38, %v810
        %v812 = vsel %vm809, %v811, %v807
        %v813 = vmul.f32 1.0, %v812
        %v814 = vrcp.pop %v726
        %v815 = vmul.f32 %v726, %v814
        %v816 = vsub.f32 1.0, %v815
        %v817 = vmul.f32 %v814, %v816
        %v818 = vadd.f32 %v814, %v817
        %vm819 = vweird.f32 %v726
        %vm820 = vweird.f32 %v814
        %vm821 = vmor %vm819, %vm820
        %v822 = vsel %vm821, %v814, %v818
        %v823 = vand.u32 2147483647, %v726
        %vm824 = vcmp.eq.f32.partialorder %v823, 8.507059e+37
        %v825 = vand.u32 %v726, 2147483648
        %v826 = vor.u32 1.1754944e-38, %v825
        %v827 = vsel %vm824, %v826, %v822
        %v828 = vmul.f32 1.0, %v827
        %v829 = vrcp.pop %v727
        %v830 = vmul.f32 %v727, %v829
        %v831 = vsub.f32 1.0, %v830
        %v832 = vmul.f32 %v829, %v831
        %v833 = vadd.f32 %v829, %v832
        %vm834 = vweird.f32 %v727
        %vm835 = vweird.f32 %v829
        %vm836 = vmor %vm834, %vm835
        %v837 = vsel %vm836, %v829, %v833
        %v838 = vand.u32 2147483647, %v727
        %vm839 = vcmp.eq.f32.partialorder %v838, 8.507059e+37
        %v840 = vand.u32 %v727, 2147483648
        %v841 = vor.u32 1.1754944e-38, %v840
        %v842 = vsel %vm839, %v841, %v837
        %v843 = vmul.f32 1.0, %v842
        %v844 = vrcp.pop %v728
        %v845 = vmul.f32 %v728, %v844
        %v846 = vsub.f32 1.0, %v845
        %v847 = vmul.f32 %v844, %v846
        %v848 = vadd.f32 %v844, %v847
        %vm849 = vweird.f32 %v728
        %vm850 = vweird.f32 %v844
        %vm851 = vmor %vm849, %vm850
        %v852 = vsel %vm851, %v844, %v848
        %v853 = vand.u32 2147483647, %v728
        %vm854 = vcmp.eq.f32.partialorder %v853, 8.507059e+37
        %v855 = vand.u32 %v728, 2147483648
        %v856 = vor.u32 1.1754944e-38, %v855
        %v857 = vsel %vm854, %v856, %v852
        %v858 = vmul.f32 1.0, %v857
        %v859 = vrcp.pop %v729
        %v860 = vmul.f32 %v729, %v859
        %v861 = vsub.f32 1.0, %v860
        %v862 = vmul.f32 %v859, %v861
        %v863 = vadd.f32 %v859, %v862
        %vm864 = vweird.f32 %v729
        %vm865 = vweird.f32 %v859
        %vm866 = vmor %vm864, %vm865
        %v867 = vsel %vm866, %v859, %v863
        %v868 = vand.u32 2147483647, %v729
        %vm869 = vcmp.eq.f32.partialorder %v868, 8.507059e+37
        %v870 = vand.u32 %v729, 2147483648
        %v871 = vor.u32 1.1754944e-38, %v870
        %v872 = vsel %vm869, %v871, %v867
        %v873 = vmul.f32 1.0, %v872
        %v874 = vrcp.pop %v730
        %v875 = vmul.f32 %v730, %v874
        %v876 = vsub.f32 1.0, %v875
        %v877 = vmul.f32 %v874, %v876
        %v878 = vadd.f32 %v874, %v877
        %vm879 = vweird.f32 %v730
        %vm880 = vweird.f32 %v874
        %vm881 = vmor %vm879, %vm880
        %v882 = vsel %vm881, %v874, %v878
        %v883 = vand.u32 2147483647, %v730
        %vm884 = vcmp.eq.f32.partialorder %v883, 8.507059e+37
        %v885 = vand.u32 %v730, 2147483648
        %v886 = vor.u32 1.1754944e-38, %v885
        %v887 = vsel %vm884, %v886, %v882
        %v888 = vmul.f32 1.0, %v887
        %v889 = vrcp.pop %v731
        %v890 = vmul.f32 %v731, %v889
        %v891 = vsub.f32 1.0, %v890
        %v892 = vmul.f32 %v889, %v891
        %v893 = vadd.f32 %v889, %v892
        %vm894 = vweird.f32 %v731
        %vm895 = vweird.f32 %v889
        %vm896 = vmor %vm894, %vm895
        %v897 = vsel %vm896, %v889, %v893
        %v898 = vand.u32 2147483647, %v731
        %vm899 = vcmp.eq.f32.partialorder %v898, 8.507059e+37
        %v900 = vand.u32 %v731, 2147483648
        %v901 = vor.u32 1.1754944e-38, %v900
        %v902 = vsel %vm899, %v901, %v897
        %v903 = vmul.f32 1.0, %v902
        %v904 = vrcp.pop %v732
        %v905 = vmul.f32 %v732, %v904
        %v906 = vsub.f32 1.0, %v905
        %v907 = vmul.f32 %v904, %v906
        %v908 = vadd.f32 %v904, %v907
        %vm909 = vweird.f32 %v732
        %vm910 = vweird.f32 %v904
        %vm911 = vmor %vm909, %vm910
        %v912 = vsel %vm911, %v904, %v908
        %v913 = vand.u32 2147483647, %v732
        %vm914 = vcmp.eq.f32.partialorder %v913, 8.507059e+37
        %v915 = vand.u32 %v732, 2147483648
        %v916 = vor.u32 1.1754944e-38, %v915
        %v917 = vsel %vm914, %v916, %v912
        %v918 = vmul.f32 1.0, %v917
        %v919 = vrcp.pop %v733
        %v920 = vmul.f32 %v733, %v919
        %v921 = vsub.f32 1.0, %v920
        %v922 = vmul.f32 %v919, %v921
        %v923 = vadd.f32 %v919, %v922
        %vm924 = vweird.f32 %v733
        %vm925 = vweird.f32 %v919
        %vm926 = vmor %vm924, %vm925
        %v927 = vsel %vm926, %v919, %v923
        %v928 = vand.u32 2147483647, %v733
        %vm929 = vcmp.eq.f32.partialorder %v928, 8.507059e+37
        %v930 = vand.u32 %v733, 2147483648
        %v931 = vor.u32 1.1754944e-38, %v930
        %v932 = vsel %vm929, %v931, %v927
        %v933 = vmul.f32 1.0, %v932
        %v934 = vrcp.pop %v734
        %v935 = vmul.f32 %v734, %v934
        %v936 = vsub.f32 1.0, %v935
        %v937 = vmul.f32 %v934, %v936
        %v938 = vadd.f32 %v934, %v937
        %vm939 = vweird.f32 %v734
        %vm940 = vweird.f32 %v934
        %vm941 = vmor %vm939, %vm940
        %v942 = vsel %vm941, %v934, %v938
        %v943 = vand.u32 2147483647, %v734
        %vm944 = vcmp.eq.f32.partialorder %v943, 8.507059e+37
        %v945 = vand.u32 %v734, 2147483648
        %v946 = vor.u32 1.1754944e-38, %v945
        %v947 = vsel %vm944, %v946, %v942
        %v948 = vmul.f32 1.0, %v947
        %v949 = vrcp.pop %v735
        %v950 = vmul.f32 %v735, %v949
        %v951 = vsub.f32 1.0, %v950
        %v952 = vmul.f32 %v949, %v951
        %v953 = vadd.f32 %v949, %v952
        %vm954 = vweird.f32 %v735
        %vm955 = vweird.f32 %v949
        %vm956 = vmor %vm954, %vm955
        %v957 = vsel %vm956, %v949, %v953
        %v958 = vand.u32 2147483647, %v735
        %vm959 = vcmp.eq.f32.partialorder %v958, 8.507059e+37
        %v960 = vand.u32 %v735, 2147483648
        %v961 = vor.u32 1.1754944e-38, %v960
        %v962 = vsel %vm959, %v961, %v957
        %v963 = vmul.f32 1.0, %v962
        %v964 = vrcp.pop %v736
        %v965 = vmul.f32 %v736, %v964
        %v966 = vsub.f32 1.0, %v965
        %v967 = vmul.f32 %v964, %v966
        %v968 = vadd.f32 %v964, %v967
        %vm969 = vweird.f32 %v736
        %vm970 = vweird.f32 %v964
        %vm971 = vmor %vm969, %vm970
        %v972 = vsel %vm971, %v964, %v968
        %v973 = vand.u32 2147483647, %v736
        %vm974 = vcmp.eq.f32.partialorder %v973, 8.507059e+37
        %v975 = vand.u32 %v736, 2147483648
        %v976 = vor.u32 1.1754944e-38, %v975
        %v977 = vsel %vm974, %v976, %v972
        %v978 = vmul.f32 1.0, %v977
        %v979 = vrcp.pop %v737
        %v980 = vmul.f32 %v737, %v979
        %v981 = vsub.f32 1.0, %v980
        %v982 = vmul.f32 %v979, %v981
        %v983 = vadd.f32 %v979, %v982
        %vm984 = vweird.f32 %v737
        %vm985 = vweird.f32 %v979
        %vm986 = vmor %vm984, %vm985
        %v987 = vsel %vm986, %v979, %v983
        %v988 = vand.u32 2147483647, %v737
        %vm989 = vcmp.eq.f32.partialorder %v988, 8.507059e+37
        %v990 = vand.u32 %v737, 2147483648
        %v991 = vor.u32 1.1754944e-38, %v990
        %v992 = vsel %vm989, %v991, %v987
        %v993 = vmul.f32 1.0, %v992
        %v994 = vrcp.pop %v738
        %v995 = vmul.f32 %v738, %v994
        %v996 = vsub.f32 1.0, %v995
        %v997 = vmul.f32 %v994, %v996
        %v998 = vadd.f32 %v994, %v997
        %vm999 = vweird.f32 %v738
        %vm1000 = vweird.f32 %v994
        %vm1001 = vmor %vm999, %vm1000
        %v1002 = vsel %vm1001, %v994, %v998
        %v1003 = vand.u32 2147483647, %v738
        %vm1004 = vcmp.eq.f32.partialorder %v1003, 8.507059e+37
        %v1005 = vand.u32 %v738, 2147483648
        %v1006 = vor.u32 1.1754944e-38, %v1005
        %v1007 = vsel %vm1004, %v1006, %v1002
        %v1008 = vmul.f32 1.0, %v1007
        %v1009 = vrcp.pop %v739
        %v1010 = vmul.f32 %v739, %v1009
        %v1011 = vsub.f32 1.0, %v1010
        %v1012 = vmul.f32 %v1009, %v1011
        %v1013 = vadd.f32 %v1009, %v1012
        %vm1014 = vweird.f32 %v739
        %vm1015 = vweird.f32 %v1009
        %vm1016 = vmor %vm1014, %vm1015
        %v1017 = vsel %vm1016, %v1009, %v1013
        %v1018 = vand.u32 2147483647, %v739
        %vm1019 = vcmp.eq.f32.partialorder %v1018, 8.507059e+37
        %v1020 = vand.u32 %v739, 2147483648
        %v1021 = vor.u32 1.1754944e-38, %v1020
        %v1022 = vsel %vm1019, %v1021, %v1017
        %v1023 = vmul.f32 1.0, %v1022
        %v1024 = vrcp.pop %v740
        %v1025 = vmul.f32 %v740, %v1024
        %v1026 = vsub.f32 1.0, %v1025
        %v1027 = vmul.f32 %v1024, %v1026
        %v1028 = vadd.f32 %v1024, %v1027
        %vm1029 = vweird.f32 %v740
        %vm1030 = vweird.f32 %v1024
        %vm1031 = vmor %vm1029, %vm1030
        %v1032 = vsel %vm1031, %v1024, %v1028
        %v1033 = vand.u32 2147483647, %v740
        %vm1034 = vcmp.eq.f32.partialorder %v1033, 8.507059e+37
        %v1035 = vand.u32 %v740, 2147483648
        %v1036 = vor.u32 1.1754944e-38, %v1035
        %v1037 = vsel %vm1034, %v1036, %v1032
        %v1038 = vmul.f32 1.0, %v1037
        %v1039 = vrcp.pop %v741
        %v1040 = vmul.f32 %v741, %v1039
        %v1041 = vsub.f32 1.0, %v1040
        %v1042 = vmul.f32 %v1039, %v1041
        %v1043 = vadd.f32 %v1039, %v1042
        %vm1044 = vweird.f32 %v741
        %vm1045 = vweird.f32 %v1039
        %vm1046 = vmor %vm1044, %vm1045
        %v1047 = vsel %vm1046, %v1039, %v1043
        %v1048 = vand.u32 2147483647, %v741
        %vm1049 = vcmp.eq.f32.partialorder %v1048, 8.507059e+37
        %v1050 = vand.u32 %v741, 2147483648
        %v1051 = vor.u32 1.1754944e-38, %v1050
        %v1052 = vsel %vm1049, %v1051, %v1047
        %v1053 = vmul.f32 1.0, %v1052
        %v1054 = vrcp.pop %v742
        %v1055 = vmul.f32 %v742, %v1054
        %v1056 = vsub.f32 1.0, %v1055
        %v1057 = vmul.f32 %v1054, %v1056
        %v1058 = vadd.f32 %v1054, %v1057
        %vm1059 = vweird.f32 %v742
        %vm1060 = vweird.f32 %v1054
        %vm1061 = vmor %vm1059, %vm1060
        %v1062 = vsel %vm1061, %v1054, %v1058
        %v1063 = vand.u32 2147483647, %v742
        %vm1064 = vcmp.eq.f32.partialorder %v1063, 8.507059e+37
        %v1065 = vand.u32 %v742, 2147483648
        %v1066 = vor.u32 1.1754944e-38, %v1065
        %v1067 = vsel %vm1064, %v1066, %v1062
        %v1068 = vmul.f32 1.0, %v1067
        %v1069 = vrcp.pop %v743
        %v1070 = vmul.f32 %v743, %v1069
        %v1071 = vsub.f32 1.0, %v1070
        %v1072 = vmul.f32 %v1069, %v1071
        %v1073 = vadd.f32 %v1069, %v1072
        %vm1074 = vweird.f32 %v743
        %vm1075 = vweird.f32 %v1069
        %vm1076 = vmor %vm1074, %vm1075
        %v1077 = vsel %vm1076, %v1069, %v1073
        %v1078 = vand.u32 2147483647, %v743
        %vm1079 = vcmp.eq.f32.partialorder %v1078, 8.507059e+37
        %v1080 = vand.u32 %v743, 2147483648
        %v1081 = vor.u32 1.1754944e-38, %v1080
        %v1082 = vsel %vm1079, %v1081, %v1077
        %v1083 = vmul.f32 1.0, %v1082
        %v1084 = vrcp.pop %v744
        %v1085 = vmul.f32 %v744, %v1084
        %v1086 = vsub.f32 1.0, %v1085
        %v1087 = vmul.f32 %v1084, %v1086
        %v1088 = vadd.f32 %v1084, %v1087
        %vm1089 = vweird.f32 %v744
        %vm1090 = vweird.f32 %v1084
        %vm1091 = vmor %vm1089, %vm1090
        %v1092 = vsel %vm1091, %v1084, %v1088
        %v1093 = vand.u32 2147483647, %v744
        %vm1094 = vcmp.eq.f32.partialorder %v1093, 8.507059e+37
        %v1095 = vand.u32 %v744, 2147483648
        %v1096 = vor.u32 1.1754944e-38, %v1095
        %v1097 = vsel %vm1094, %v1096, %v1092
        %v1098 = vmul.f32 1.0, %v1097
        %v1099 = vrcp.pop %v745
        %v1100 = vmul.f32 %v745, %v1099
        %v1101 = vsub.f32 1.0, %v1100
        %v1102 = vmul.f32 %v1099, %v1101
        %v1103 = vadd.f32 %v1099, %v1102
        %vm1104 = vweird.f32 %v745
        %vm1105 = vweird.f32 %v1099
        %vm1106 = vmor %vm1104, %vm1105
        %v1107 = vsel %vm1106, %v1099, %v1103
        %v1108 = vand.u32 2147483647, %v745
        %vm1109 = vcmp.eq.f32.partialorder %v1108, 8.507059e+37
        %v1110 = vand.u32 %v745, 2147483648
        %v1111 = vor.u32 1.1754944e-38, %v1110
        %v1112 = vsel %vm1109, %v1111, %v1107
        %v1113 = vmul.f32 1.0, %v1112
        %v1114 = vrcp.pop %v746
        %v1115 = vmul.f32 %v746, %v1114
        %v1116 = vsub.f32 1.0, %v1115
        %v1117 = vmul.f32 %v1114, %v1116
        %v1118 = vadd.f32 %v1114, %v1117
        %vm1119 = vweird.f32 %v746
        %vm1120 = vweird.f32 %v1114
        %vm1121 = vmor %vm1119, %vm1120
        %v1122 = vsel %vm1121, %v1114, %v1118
        %v1123 = vand.u32 2147483647, %v746
        %vm1124 = vcmp.eq.f32.partialorder %v1123, 8.507059e+37
        %v1125 = vand.u32 %v746, 2147483648
        %v1126 = vor.u32 1.1754944e-38, %v1125
        %v1127 = vsel %vm1124, %v1126, %v1122
        %v1128 = vmul.f32 1.0, %v1127
        %v1129 = vrcp.pop %v747
        %v1130 = vmul.f32 %v747, %v1129
        %v1131 = vsub.f32 1.0, %v1130
        %v1132 = vmul.f32 %v1129, %v1131
        %v1133 = vadd.f32 %v1129, %v1132
        %vm1134 = vweird.f32 %v747
        %vm1135 = vweird.f32 %v1129
        %vm1136 = vmor %vm1134, %vm1135
        %v1137 = vsel %vm1136, %v1129, %v1133
        %v1138 = vand.u32 2147483647, %v747
        %vm1139 = vcmp.eq.f32.partialorder %v1138, 8.507059e+37
        %v1140 = vand.u32 %v747, 2147483648
        %v1141 = vor.u32 1.1754944e-38, %v1140
        %v1142 = vsel %vm1139, %v1141, %v1137
        %v1143 = vmul.f32 1.0, %v1142
        %v1144 = vrcp.pop %v748
        %v1145 = vmul.f32 %v748, %v1144
        %v1146 = vsub.f32 1.0, %v1145
        %v1147 = vmul.f32 %v1144, %v1146
        %v1148 = vadd.f32 %v1144, %v1147
        %vm1149 = vweird.f32 %v748
        %vm1150 = vweird.f32 %v1144
        %vm1151 = vmor %vm1149, %vm1150
        %v1152 = vsel %vm1151, %v1144, %v1148
        %v1153 = vand.u32 2147483647, %v748
        %vm1154 = vcmp.eq.f32.partialorder %v1153, 8.507059e+37
        %v1155 = vand.u32 %v748, 2147483648
        %v1156 = vor.u32 1.1754944e-38, %v1155
        %v1157 = vsel %vm1154, %v1156, %v1152
        %v1158 = vmul.f32 1.0, %v1157
        %v1159 = vrcp.pop %v749
        %v1160 = vmul.f32 %v749, %v1159
        %v1161 = vsub.f32 1.0, %v1160
        %v1162 = vmul.f32 %v1159, %v1161
        %v1163 = vadd.f32 %v1159, %v1162
        %vm1164 = vweird.f32 %v749
        %vm1165 = vweird.f32 %v1159
        %vm1166 = vmor %vm1164, %vm1165
        %v1167 = vsel %vm1166, %v1159, %v1163
        %v1168 = vand.u32 2147483647, %v749
        %vm1169 = vcmp.eq.f32.partialorder %v1168, 8.507059e+37
        %v1170 = vand.u32 %v749, 2147483648
        %v1171 = vor.u32 1.1754944e-38, %v1170
        %v1172 = vsel %vm1169, %v1171, %v1167
        %v1173 = vmul.f32 1.0, %v1172
        %v1174 = vrcp.pop %v750
        %v1175 = vmul.f32 %v750, %v1174
        %v1176 = vsub.f32 1.0, %v1175
        %v1177 = vmul.f32 %v1174, %v1176
        %v1178 = vadd.f32 %v1174, %v1177
        %vm1179 = vweird.f32 %v750
        %vm1180 = vweird.f32 %v1174
        %vm1181 = vmor %vm1179, %vm1180
        %v1182 = vsel %vm1181, %v1174, %v1178
        %v1183 = vand.u32 2147483647, %v750
        %vm1184 = vcmp.eq.f32.partialorder %v1183, 8.507059e+37
        %v1185 = vand.u32 %v750, 2147483648
        %v1186 = vor.u32 1.1754944e-38, %v1185
        %v1187 = vsel %vm1184, %v1186, %v1182
        %v1188 = vmul.f32 1.0, %v1187
        %v1189 = vrcp.pop %v751
        %v1190 = vmul.f32 %v751, %v1189
        %v1191 = vsub.f32 1.0, %v1190
        %v1192 = vmul.f32 %v1189, %v1191
        %v1193 = vadd.f32 %v1189, %v1192
        %vm1194 = vweird.f32 %v751
        %vm1195 = vweird.f32 %v1189
        %vm1196 = vmor %vm1194, %vm1195
        %v1197 = vsel %vm1196, %v1189, %v1193
        %v1198 = vand.u32 2147483647, %v751
        %vm1199 = vcmp.eq.f32.partialorder %v1198, 8.507059e+37
        %v1200 = vand.u32 %v751, 2147483648
        %v1201 = vor.u32 1.1754944e-38, %v1200
        %v1202 = vsel %vm1199, %v1201, %v1197
        %v1203 = vmul.f32 1.0, %v1202
        %v1204 = vrcp.pop %v752
        %v1205 = vmul.f32 %v752, %v1204
        %v1206 = vsub.f32 1.0, %v1205
        %v1207 = vmul.f32 %v1204, %v1206
        %v1208 = vadd.f32 %v1204, %v1207
        %vm1209 = vweird.f32 %v752
        %vm1210 = vweird.f32 %v1204
        %vm1211 = vmor %vm1209, %vm1210
        %v1212 = vsel %vm1211, %v1204, %v1208
        %v1213 = vand.u32 2147483647, %v752
        %vm1214 = vcmp.eq.f32.partialorder %v1213, 8.507059e+37
        %v1215 = vand.u32 %v752, 2147483648
        %v1216 = vor.u32 1.1754944e-38, %v1215
        %v1217 = vsel %vm1214, %v1216, %v1212
        %v1218 = vmul.f32 1.0, %v1217
        %v1219 = vrcp.pop %v753
        %v1220 = vmul.f32 %v753, %v1219
        %v1221 = vsub.f32 1.0, %v1220
        %v1222 = vmul.f32 %v1219, %v1221
        %v1223 = vadd.f32 %v1219, %v1222
        %vm1224 = vweird.f32 %v753
        %vm1225 = vweird.f32 %v1219
        %vm1226 = vmor %vm1224, %vm1225
        %v1227 = vsel %vm1226, %v1219, %v1223
        %v1228 = vand.u32 2147483647, %v753
        %vm1229 = vcmp.eq.f32.partialorder %v1228, 8.507059e+37
        %v1230 = vand.u32 %v753, 2147483648
        %v1231 = vor.u32 1.1754944e-38, %v1230
        %v1232 = vsel %vm1229, %v1231, %v1227
        %v1233 = vmul.f32 1.0, %v1232
        %v1234 = vmul.f32 %v768, 1.0614054
        %v1235 = vmul.f32 %v783, 1.0614054
        %v1236 = vmul.f32 %v798, 1.0614054
        %v1237 = vmul.f32 %v813, 1.0614054
        %v1238 = vmul.f32 %v828, 1.0614054
        %v1239 = vmul.f32 %v843, 1.0614054
        %v1240 = vmul.f32 %v858, 1.0614054
        %v1241 = vmul.f32 %v873, 1.0614054
        %v1242 = vmul.f32 %v888, 1.0614054
        %v1243 = vmul.f32 %v903, 1.0614054
        %v1244 = vmul.f32 %v918, 1.0614054
        %v1245 = vmul.f32 %v933, 1.0614054
        %v1246 = vmul.f32 %v948, 1.0614054
        %v1247 = vmul.f32 %v963, 1.0614054
        %v1248 = vmul.f32 %v978, 1.0614054
        %v1249 = vmul.f32 %v993, 1.0614054
        %v1250 = vmul.f32 %v1008, 1.0614054
        %v1251 = vmul.f32 %v1023, 1.0614054
        %v1252 = vmul.f32 %v1038, 1.0614054
        %v1253 = vmul.f32 %v1053, 1.0614054
        %v1254 = vmul.f32 %v1068, 1.0614054
        %v1255 = vmul.f32 %v1083, 1.0614054
        %v1256 = vmul.f32 %v1098, 1.0614054
        %v1257 = vmul.f32 %v1113, 1.0614054
        %v1258 = vmul.f32 %v1128, 1.0614054
        %v1259 = vmul.f32 %v1143, 1.0614054
        %v1260 = vmul.f32 %v1158, 1.0614054
        %v1261 = vmul.f32 %v1173, 1.0614054
        %v1262 = vmul.f32 %v1188, 1.0614054
        %v1263 = vmul.f32 %v1203, 1.0614054
        %v1264 = vmul.f32 %v1218, 1.0614054
        %v1265 = vmul.f32 %v1233, 1.0614054
        %v1266 = vadd.f32 %v1234, -1.4531521
        %v1267 = vadd.f32 %v1235, -1.4531521
        %v1268 = vadd.f32 %v1236, -1.4531521
        %v1269 = vadd.f32 %v1237, -1.4531521
        %v1270 = vadd.f32 %v1238, -1.4531521
        %v1271 = vadd.f32 %v1239, -1.4531521
        %v1272 = vadd.f32 %v1240, -1.4531521
        %v1273 = vadd.f32 %v1241, -1.4531521
        %v1274 = vadd.f32 %v1242, -1.4531521
        %v1275 = vadd.f32 %v1243, -1.4531521
        %v1276 = vadd.f32 %v1244, -1.4531521
        %v1277 = vadd.f32 %v1245, -1.4531521
        %v1278 = vadd.f32 %v1246, -1.4531521
        %v1279 = vadd.f32 %v1247, -1.4531521
        %v1280 = vadd.f32 %v1248, -1.4531521
        %v1281 = vadd.f32 %v1249, -1.4531521
        %v1282 = vadd.f32 %v1250, -1.4531521
        %v1283 = vadd.f32 %v1251, -1.4531521
        %v1284 = vadd.f32 %v1252, -1.4531521
        %v1285 = vadd.f32 %v1253, -1.4531521
        %v1286 = vadd.f32 %v1254, -1.4531521
        %v1287 = vadd.f32 %v1255, -1.4531521
        %v1288 = vadd.f32 %v1256, -1.4531521
        %v1289 = vadd.f32 %v1257, -1.4531521
        %v1290 = vadd.f32 %v1258, -1.4531521
        %v1291 = vadd.f32 %v1259, -1.4531521
        %v1292 = vadd.f32 %v1260, -1.4531521
        %v1293 = vadd.f32 %v1261, -1.4531521
        %v1294 = vadd.f32 %v1262, -1.4531521
        %v1295 = vadd.f32 %v1263, -1.4531521
        %v1296 = vadd.f32 %v1264, -1.4531521
        %v1297 = vadd.f32 %v1265, -1.4531521
        %v1298 = vmul.f32 %v1266, %v768
        %v1299 = vmul.f32 %v1267, %v783
        %v1300 = vmul.f32 %v1268, %v798
        %v1301 = vmul.f32 %v1269, %v813
        %v1302 = vmul.f32 %v1270, %v828
        %v1303 = vmul.f32 %v1271, %v843
        %v1304 = vmul.f32 %v1272, %v858
        %v1305 = vmul.f32 %v1273, %v873
        %v1306 = vmul.f32 %v1274, %v888
        %v1307 = vmul.f32 %v1275, %v903
        %v1308 = vmul.f32 %v1276, %v918
        %v1309 = vmul.f32 %v1277, %v933
        %v1310 = vmul.f32 %v1278, %v948
        %v1311 = vmul.f32 %v1279, %v963
        %v1312 = vmul.f32 %v1280, %v978
        %v1313 = vmul.f32 %v1281, %v993
        %v1314 = vmul.f32 %v1282, %v1008
        %v1315 = vmul.f32 %v1283, %v1023
        %v1316 = vmul.f32 %v1284, %v1038
        %v1317 = vmul.f32 %v1285, %v1053
        %v1318 = vmul.f32 %v1286, %v1068
        %v1319 = vmul.f32 %v1287, %v1083
        %v1320 = vmul.f32 %v1288, %v1098
        %v1321 = vmul.f32 %v1289, %v1113
        %v1322 = vmul.f32 %v1290, %v1128
        %v1323 = vmul.f32 %v1291, %v1143
        %v1324 = vmul.f32 %v1292, %v1158
        %v1325 = vmul.f32 %v1293, %v1173
        %v1326 = vmul.f32 %v1294, %v1188
        %v1327 = vmul.f32 %v1295, %v1203
        %v1328 = vmul.f32 %v1296, %v1218
        %v1329 = vmul.f32 %v1297, %v1233
        %v1330 = vadd.f32 %v1298, 1.4214138
        %v1331 = vadd.f32 %v1299, 1.4214138
        %v1332 = vadd.f32 %v1300, 1.4214138
        %v1333 = vadd.f32 %v1301, 1.4214138
        %v1334 = vadd.f32 %v1302, 1.4214138
        %v1335 = vadd.f32 %v1303, 1.4214138
        %v1336 = vadd.f32 %v1304, 1.4214138
        %v1337 = vadd.f32 %v1305, 1.4214138
        %v1338 = vadd.f32 %v1306, 1.4214138
        %v1339 = vadd.f32 %v1307, 1.4214138
        %v1340 = vadd.f32 %v1308, 1.4214138
        %v1341 = vadd.f32 %v1309, 1.4214138
        %v1342 = vadd.f32 %v1310, 1.4214138
        %v1343 = vadd.f32 %v1311, 1.4214138
        %v1344 = vadd.f32 %v1312, 1.4214138
        %v1345 = vadd.f32 %v1313, 1.4214138
        %v1346 = vadd.f32 %v1314, 1.4214138
        %v1347 = vadd.f32 %v1315, 1.4214138
        %v1348 = vadd.f32 %v1316, 1.4214138
        %v1349 = vadd.f32 %v1317, 1.4214138
        %v1350 = vadd.f32 %v1318, 1.4214138
        %v1351 = vadd.f32 %v1319, 1.4214138
        %v1352 = vadd.f32 %v1320, 1.4214138
        %v1353 = vadd.f32 %v1321, 1.4214138
        %v1354 = vadd.f32 %v1322, 1.4214138
        %v1355 = vadd.f32 %v1323, 1.4214138
        %v1356 = vadd.f32 %v1324, 1.4214138
        %v1357 = vadd.f32 %v1325, 1.4214138
        %v1358 = vadd.f32 %v1326, 1.4214138
        %v1359 = vadd.f32 %v1327, 1.4214138
        %v1360 = vadd.f32 %v1328, 1.4214138
        %v1361 = vadd.f32 %v1329, 1.4214138
        %v1362 = vmul.f32 %v1330, %v768
        %v1363 = vmul.f32 %v1331, %v783
        %v1364 = vmul.f32 %v1332, %v798
        %v1365 = vmul.f32 %v1333, %v813
        %v1366 = vmul.f32 %v1334, %v828
        %v1367 = vmul.f32 %v1335, %v843
        %v1368 = vmul.f32 %v1336, %v858
        %v1369 = vmul.f32 %v1337, %v873
        %v1370 = vmul.f32 %v1338, %v888
        %v1371 = vmul.f32 %v1339, %v903
        %v1372 = vmul.f32 %v1340, %v918
        %v1373 = vmul.f32 %v1341, %v933
        %v1374 = vmul.f32 %v1342, %v948
        %v1375 = vmul.f32 %v1343, %v963
        %v1376 = vmul.f32 %v1344, %v978
        %v1377 = vmul.f32 %v1345, %v993
        %v1378 = vmul.f32 %v1346, %v1008
        %v1379 = vmul.f32 %v1347, %v1023
        %v1380 = vmul.f32 %v1348, %v1038
        %v1381 = vmul.f32 %v1349, %v1053
        %v1382 = vmul.f32 %v1350, %v1068
        %v1383 = vmul.f32 %v1351, %v1083
        %v1384 = vmul.f32 %v1352, %v1098
        %v1385 = vmul.f32 %v1353, %v1113
        %v1386 = vmul.f32 %v1354, %v1128
        %v1387 = vmul.f32 %v1355, %v1143
        %v1388 = vmul.f32 %v1356, %v1158
        %v1389 = vmul.f32 %v1357, %v1173
        %v1390 = vmul.f32 %v1358, %v1188
        %v1391 = vmul.f32 %v1359, %v1203
        %v1392 = vmul.f32 %v1360, %v1218
        %v1393 = vmul.f32 %v1361, %v1233
        %v1394 = vadd.f32 %v1362, -0.28449672
        %v1395 = vadd.f32 %v1363, -0.28449672
        %v1396 = vadd.f32 %v1364, -0.28449672
        %v1397 = vadd.f32 %v1365, -0.28449672
        %v1398 = vadd.f32 %v1366, -0.28449672
        %v1399 = vadd.f32 %v1367, -0.28449672
        %v1400 = vadd.f32 %v1368, -0.28449672
        %v1401 = vadd.f32 %v1369, -0.28449672
        %v1402 = vadd.f32 %v1370, -0.28449672
        %v1403 = vadd.f32 %v1371, -0.28449672
        %v1404 = vadd.f32 %v1372, -0.28449672
        %v1405 = vadd.f32 %v1373, -0.28449672
        %v1406 = vadd.f32 %v1374, -0.28449672
        %v1407 = vadd.f32 %v1375, -0.28449672
        %v1408 = vadd.f32 %v1376, -0.28449672
        %v1409 = vadd.f32 %v1377, -0.28449672
        %v1410 = vadd.f32 %v1378, -0.28449672
        %v1411 = vadd.f32 %v1379, -0.28449672
        %v1412 = vadd.f32 %v1380, -0.28449672
        %v1413 = vadd.f32 %v1381, -0.28449672
        %v1414 = vadd.f32 %v1382, -0.28449672
        %v1415 = vadd.f32 %v1383, -0.28449672
        %v1416 = vadd.f32 %v1384, -0.28449672
        %v1417 = vadd.f32 %v1385, -0.28449672
        %v1418 = vadd.f32 %v1386, -0.28449672
        %v1419 = vadd.f32 %v1387, -0.28449672
        %v1420 = vadd.f32 %v1388, -0.28449672
        %v1421 = vadd.f32 %v1389, -0.28449672
        %v1422 = vadd.f32 %v1390, -0.28449672
        %v1423 = vadd.f32 %v1391, -0.28449672
        %v1424 = vadd.f32 %v1392, -0.28449672
        %v1425 = vadd.f32 %v1393, -0.28449672
        %v1426 = vmul.f32 %v1394, %v768
        %v1427 = vmul.f32 %v1395, %v783
        %v1428 = vmul.f32 %v1396, %v798
        %v1429 = vmul.f32 %v1397, %v813
        %v1430 = vmul.f32 %v1398, %v828
        %v1431 = vmul.f32 %v1399, %v843
        %v1432 = vmul.f32 %v1400, %v858
        %v1433 = vmul.f32 %v1401, %v873
        %v1434 = vmul.f32 %v1402, %v888
        %v1435 = vmul.f32 %v1403, %v903
        %v1436 = vmul.f32 %v1404, %v918
        %v1437 = vmul.f32 %v1405, %v933
        %v1438 = vmul.f32 %v1406, %v948
        %v1439 = vmul.f32 %v1407, %v963
        %v1440 = vmul.f32 %v1408, %v978
        %v1441 = vmul.f32 %v1409, %v993
        %v1442 = vmul.f32 %v1410, %v1008
        %v1443 = vmul.f32 %v1411, %v1023
        %v1444 = vmul.f32 %v1412, %v1038
        %v1445 = vmul.f32 %v1413, %v1053
        %v1446 = vmul.f32 %v1414, %v1068
        %v1447 = vmul.f32 %v1415, %v1083
        %v1448 = vmul.f32 %v1416, %v1098
        %v1449 = vmul.f32 %v1417, %v1113
        %v1450 = vmul.f32 %v1418, %v1128
        %v1451 = vmul.f32 %v1419, %v1143
        %v1452 = vmul.f32 %v1420, %v1158
        %v1453 = vmul.f32 %v1421, %v1173
        %v1454 = vmul.f32 %v1422, %v1188
        %v1455 = vmul.f32 %v1423, %v1203
        %v1456 = vmul.f32 %v1424, %v1218
        %v1457 = vmul.f32 %v1425, %v1233
        %v1458 = vadd.f32 %v1426, 0.2548296
        %v1459 = vadd.f32 %v1427, 0.2548296
        %v1460 = vadd.f32 %v1428, 0.2548296
        %v1461 = vadd.f32 %v1429, 0.2548296
        %v1462 = vadd.f32 %v1430, 0.2548296
        %v1463 = vadd.f32 %v1431, 0.2548296
        %v1464 = vadd.f32 %v1432, 0.2548296
        %v1465 = vadd.f32 %v1433, 0.2548296
        %v1466 = vadd.f32 %v1434, 0.2548296
        %v1467 = vadd.f32 %v1435, 0.2548296
        %v1468 = vadd.f32 %v1436, 0.2548296
        %v1469 = vadd.f32 %v1437, 0.2548296
        %v1470 = vadd.f32 %v1438, 0.2548296
        %v1471 = vadd.f32 %v1439, 0.2548296
        %v1472 = vadd.f32 %v1440, 0.2548296
        %v1473 = vadd.f32 %v1441, 0.2548296
        %v1474 = vadd.f32 %v1442, 0.2548296
        %v1475 = vadd.f32 %v1443, 0.2548296
        %v1476 = vadd.f32 %v1444, 0.2548296
        %v1477 = vadd.f32 %v1445, 0.2548296
        %v1478 = vadd.f32 %v1446, 0.2548296
        %v1479 = vadd.f32 %v1447, 0.2548296
        %v1480 = vadd.f32 %v1448, 0.2548296
        %v1481 = vadd.f32 %v1449, 0.2548296
        %v1482 = vadd.f32 %v1450, 0.2548296
        %v1483 = vadd.f32 %v1451, 0.2548296
        %v1484 = vadd.f32 %v1452, 0.2548296
        %v1485 = vadd.f32 %v1453, 0.2548296
        %v1486 = vadd.f32 %v1454, 0.2548296
        %v1487 = vadd.f32 %v1455, 0.2548296
        %v1488 = vadd.f32 %v1456, 0.2548296
        %v1489 = vadd.f32 %v1457, 0.2548296
        %v1490 = vmul.f32 %v1458, %v768
        %v1491 = vmul.f32 %v1459, %v783
        %v1492 = vmul.f32 %v1460, %v798
        %v1493 = vmul.f32 %v1461, %v813
        %v1494 = vmul.f32 %v1462, %v828
        %v1495 = vmul.f32 %v1463, %v843
        %v1496 = vmul.f32 %v1464, %v858
        %v1497 = vmul.f32 %v1465, %v873
        %v1498 = vmul.f32 %v1466, %v888
        %v1499 = vmul.f32 %v1467, %v903
        %v1500 = vmul.f32 %v1468, %v918
        %v1501 = vmul.f32 %v1469, %v933
        %v1502 = vmul.f32 %v1470, %v948
        %v1503 = vmul.f32 %v1471, %v963
        %v1504 = vmul.f32 %v1472, %v978
        %v1505 = vmul.f32 %v1473, %v993
        %v1506 = vmul.f32 %v1474, %v1008
        %v1507 = vmul.f32 %v1475, %v1023
        %v1508 = vmul.f32 %v1476, %v1038
        %v1509 = vmul.f32 %v1477, %v1053
        %v1510 = vmul.f32 %v1478, %v1068
        %v1511 = vmul.f32 %v1479, %v1083
        %v1512 = vmul.f32 %v1480, %v1098
        %v1513 = vmul.f32 %v1481, %v1113
        %v1514 = vmul.f32 %v1482, %v1128
        %v1515 = vmul.f32 %v1483, %v1143
        %v1516 = vmul.f32 %v1484, %v1158
        %v1517 = vmul.f32 %v1485, %v1173
        %v1518 = vmul.f32 %v1486, %v1188
        %v1519 = vmul.f32 %v1487, %v1203
        %v1520 = vmul.f32 %v1488, %v1218
        %v1521 = vmul.f32 %v1489, %v1233
        %v1522 = vsub.f32 0.0, %v658
        %v1523 = vsub.f32 0.0, %v659
        %v1524 = vsub.f32 0.0, %v660
        %v1525 = vsub.f32 0.0, %v661
        %v1526 = vsub.f32 0.0, %v662
        %v1527 = vsub.f32 0.0, %v663
        %v1528 = vsub.f32 0.0, %v664
        %v1529 = vsub.f32 0.0, %v665
        %v1530 = vsub.f32 0.0, %v666
        %v1531 = vsub.f32 0.0, %v667
        %v1532 = vsub.f32 0.0, %v668
        %v1533 = vsub.f32 0.0, %v669
        %v1534 = vsub.f32 0.0, %v670
        %v1535 = vsub.f32 0.0, %v671
        %v1536 = vsub.f32 0.0, %v672
        %v1537 = vsub.f32 0.0, %v673
        %v1538 = vsub.f32 0.0, %v674
        %v1539 = vsub.f32 0.0, %v675
        %v1540 = vsub.f32 0.0, %v676
        %v1541 = vsub.f32 0.0, %v677
        %v1542 = vsub.f32 0.0, %v678
        %v1543 = vsub.f32 0.0, %v679
        %v1544 = vsub.f32 0.0, %v680
        %v1545 = vsub.f32 0.0, %v681
        %v1546 = vsub.f32 0.0, %v682
        %v1547 = vsub.f32 0.0, %v683
        %v1548 = vsub.f32 0.0, %v684
        %v1549 = vsub.f32 0.0, %v685
        %v1550 = vsub.f32 0.0, %v686
        %v1551 = vsub.f32 0.0, %v687
        %v1552 = vsub.f32 0.0, %v688
        %v1553 = vsub.f32 0.0, %v689
        %v1554 = vmul.f32 %v1522, %v658
        %v1555 = vmul.f32 %v1523, %v659
        %v1556 = vmul.f32 %v1524, %v660
        %v1557 = vmul.f32 %v1525, %v661
        %v1558 = vmul.f32 %v1526, %v662
        %v1559 = vmul.f32 %v1527, %v663
        %v1560 = vmul.f32 %v1528, %v664
        %v1561 = vmul.f32 %v1529, %v665
        %v1562 = vmul.f32 %v1530, %v666
        %v1563 = vmul.f32 %v1531, %v667
        %v1564 = vmul.f32 %v1532, %v668
        %v1565 = vmul.f32 %v1533, %v669
        %v1566 = vmul.f32 %v1534, %v670
        %v1567 = vmul.f32 %v1535, %v671
        %v1568 = vmul.f32 %v1536, %v672
        %v1569 = vmul.f32 %v1537, %v673
        %v1570 = vmul.f32 %v1538, %v674
        %v1571 = vmul.f32 %v1539, %v675
        %v1572 = vmul.f32 %v1540, %v676
        %v1573 = vmul.f32 %v1541, %v677
        %v1574 = vmul.f32 %v1542, %v678
        %v1575 = vmul.f32 %v1543, %v679
        %v1576 = vmul.f32 %v1544, %v680
        %v1577 = vmul.f32 %v1545, %v681
        %v1578 = vmul.f32 %v1546, %v682
        %v1579 = vmul.f32 %v1547, %v683
        %v1580 = vmul.f32 %v1548, %v684
        %v1581 = vmul.f32 %v1549, %v685
        %v1582 = vmul.f32 %v1550, %v686
        %v1583 = vmul.f32 %v1551, %v687
        %v1584 = vmul.f32 %v1552, %v688
        %v1585 = vmul.f32 %v1553, %v689
        %v1586 = vmul.f32 %v1554, 1.442695
        %v1587 = vpow.pop %v1586
        %v1588 = vmul.f32 %v1555, 1.442695
        %v1589 = vpow.pop %v1588
        %v1590 = vmul.f32 %v1556, 1.442695
        %v1591 = vpow.pop %v1590
        %v1592 = vmul.f32 %v1557, 1.442695
        %v1593 = vpow.pop %v1592
        %v1594 = vmul.f32 %v1558, 1.442695
        %v1595 = vpow.pop %v1594
        %v1596 = vmul.f32 %v1559, 1.442695
        %v1597 = vpow.pop %v1596
        %v1598 = vmul.f32 %v1560, 1.442695
        %v1599 = vpow.pop %v1598
        %v1600 = vmul.f32 %v1561, 1.442695
        %v1601 = vpow.pop %v1600
        %v1602 = vmul.f32 %v1562, 1.442695
        %v1603 = vpow.pop %v1602
        %v1604 = vmul.f32 %v1563, 1.442695
        %v1605 = vpow.pop %v1604
        %v1606 = vmul.f32 %v1564, 1.442695
        %v1607 = vpow.pop %v1606
        %v1608 = vmul.f32 %v1565, 1.442695
        %v1609 = vpow.pop %v1608
        %v1610 = vmul.f32 %v1566, 1.442695
        %v1611 = vpow.pop %v1610
        %v1612 = vmul.f32 %v1567, 1.442695
        %v1613 = vpow.pop %v1612
        %v1614 = vmul.f32 %v1568, 1.442695
        %v1615 = vpow.pop %v1614
        %v1616 = vmul.f32 %v1569, 1.442695
        %v1617 = vpow.pop %v1616
        %v1618 = vmul.f32 %v1570, 1.442695
        %v1619 = vpow.pop %v1618
        %v1620 = vmul.f32 %v1571, 1.442695
        %v1621 = vpow.pop %v1620
        %v1622 = vmul.f32 %v1572, 1.442695
        %v1623 = vpow.pop %v1622
        %v1624 = vmul.f32 %v1573, 1.442695
        %v1625 = vpow.pop %v1624
        %v1626 = vmul.f32 %v1574, 1.442695
        %v1627 = vpow.pop %v1626
        %v1628 = vmul.f32 %v1575, 1.442695
        %v1629 = vpow.pop %v1628
        %v1630 = vmul.f32 %v1576, 1.442695
        %v1631 = vpow.pop %v1630
        %v1632 = vmul.f32 %v1577, 1.442695
        %v1633 = vpow.pop %v1632
        %v1634 = vmul.f32 %v1578, 1.442695
        %v1635 = vpow.pop %v1634
        %v1636 = vmul.f32 %v1579, 1.442695
        %v1637 = vpow.pop %v1636
        %v1638 = vmul.f32 %v1580, 1.442695
        %v1639 = vpow.pop %v1638
        %v1640 = vmul.f32 %v1581, 1.442695
        %v1641 = vpow.pop %v1640
        %v1642 = vmul.f32 %v1582, 1.442695
        %v1643 = vpow.pop %v1642
        %v1644 = vmul.f32 %v1583, 1.442695
        %v1645 = vpow.pop %v1644
        %v1646 = vmul.f32 %v1584, 1.442695
        %v1647 = vpow.pop %v1646
        %v1648 = vmul.f32 %v1585, 1.442695
        %v1649 = vpow.pop %v1648
        %v1650 = vmul.f32 %v1490, %v1587
        %v1651 = vmul.f32 %v1491, %v1589
        %v1652 = vmul.f32 %v1492, %v1591
        %v1653 = vmul.f32 %v1493, %v1593
        %v1654 = vmul.f32 %v1494, %v1595
        %v1655 = vmul.f32 %v1495, %v1597
        %v1656 = vmul.f32 %v1496, %v1599
        %v1657 = vmul.f32 %v1497, %v1601
        %v1658 = vmul.f32 %v1498, %v1603
        %v1659 = vmul.f32 %v1499, %v1605
        %v1660 = vmul.f32 %v1500, %v1607
        %v1661 = vmul.f32 %v1501, %v1609
        %v1662 = vmul.f32 %v1502, %v1611
        %v1663 = vmul.f32 %v1503, %v1613
        %v1664 = vmul.f32 %v1504, %v1615
        %v1665 = vmul.f32 %v1505, %v1617
        %v1666 = vmul.f32 %v1506, %v1619
        %v1667 = vmul.f32 %v1507, %v1621
        %v1668 = vmul.f32 %v1508, %v1623
        %v1669 = vmul.f32 %v1509, %v1625
        %v1670 = vmul.f32 %v1510, %v1627
        %v1671 = vmul.f32 %v1511, %v1629
        %v1672 = vmul.f32 %v1512, %v1631
        %v1673 = vmul.f32 %v1513, %v1633
        %v1674 = vmul.f32 %v1514, %v1635
        %v1675 = vmul.f32 %v1515, %v1637
        %v1676 = vmul.f32 %v1516, %v1639
        %v1677 = vmul.f32 %v1517, %v1641
        %v1678 = vmul.f32 %v1518, %v1643
        %v1679 = vmul.f32 %v1519, %v1645
        %v1680 = vmul.f32 %v1520, %v1647
        %v1681 = vmul.f32 %v1521, %v1649
        %v1682 = vsub.f32 1.0, %v1650
        %v1683 = vsub.f32 1.0, %v1651
        %v1684 = vsub.f32 1.0, %v1652
        %v1685 = vsub.f32 1.0, %v1653
        %v1686 = vsub.f32 1.0, %v1654
        %v1687 = vsub.f32 1.0, %v1655
        %v1688 = vsub.f32 1.0, %v1656
        %v1689 = vsub.f32 1.0, %v1657
        %v1690 = vsub.f32 1.0, %v1658
        %v1691 = vsub.f32 1.0, %v1659
        %v1692 = vsub.f32 1.0, %v1660
        %v1693 = vsub.f32 1.0, %v1661
        %v1694 = vsub.f32 1.0, %v1662
        %v1695 = vsub.f32 1.0, %v1663
        %v1696 = vsub.f32 1.0, %v1664
        %v1697 = vsub.f32 1.0, %v1665
        %v1698 = vsub.f32 1.0, %v1666
        %v1699 = vsub.f32 1.0, %v1667
        %v1700 = vsub.f32 1.0, %v1668
        %v1701 = vsub.f32 1.0, %v1669
        %v1702 = vsub.f32 1.0, %v1670
        %v1703 = vsub.f32 1.0, %v1671
        %v1704 = vsub.f32 1.0, %v1672
        %v1705 = vsub.f32 1.0, %v1673
        %v1706 = vsub.f32 1.0, %v1674
        %v1707 = vsub.f32 1.0, %v1675
        %v1708 = vsub.f32 1.0, %v1676
        %v1709 = vsub.f32 1.0, %v1677
        %v1710 = vsub.f32 1.0, %v1678
        %v1711 = vsub.f32 1.0, %v1679
        %v1712 = vsub.f32 1.0, %v1680
        %v1713 = vsub.f32 1.0, %v1681
        %vm1714 = vcmp.lt.f32.partialorder %v626, 0.0
        %vm1715 = vcmp.lt.f32.partialorder %v627, 0.0
        %vm1716 = vcmp.lt.f32.partialorder %v628, 0.0
        %vm1717 = vcmp.lt.f32.partialorder %v629, 0.0
        %vm1718 = vcmp.lt.f32.partialorder %v630, 0.0
        %vm1719 = vcmp.lt.f32.partialorder %v631, 0.0
        %vm1720 = vcmp.lt.f32.partialorder %v632, 0.0
        %vm1721 = vcmp.lt.f32.partialorder %v633, 0.0
        %vm1722 = vcmp.lt.f32.partialorder %v634, 0.0
        %vm1723 = vcmp.lt.f32.partialorder %v635, 0.0
        %vm1724 = vcmp.lt.f32.partialorder %v636, 0.0
        %vm1725 = vcmp.lt.f32.partialorder %v637, 0.0
        %vm1726 = vcmp.lt.f32.partialorder %v638, 0.0
        %vm1727 = vcmp.lt.f32.partialorder %v639, 0.0
        %vm1728 = vcmp.lt.f32.partialorder %v640, 0.0
        %vm1729 = vcmp.lt.f32.partialorder %v641, 0.0
        %vm1730 = vcmp.lt.f32.partialorder %v642, 0.0
        %vm1731 = vcmp.lt.f32.partialorder %v643, 0.0
        %vm1732 = vcmp.lt.f32.partialorder %v644, 0.0
        %vm1733 = vcmp.lt.f32.partialorder %v645, 0.0
        %vm1734 = vcmp.lt.f32.partialorder %v646, 0.0
        %vm1735 = vcmp.lt.f32.partialorder %v647, 0.0
        %vm1736 = vcmp.lt.f32.partialorder %v648, 0.0
        %vm1737 = vcmp.lt.f32.partialorder %v649, 0.0
        %vm1738 = vcmp.lt.f32.partialorder %v650, 0.0
        %vm1739 = vcmp.lt.f32.partialorder %v651, 0.0
        %vm1740 = vcmp.lt.f32.partialorder %v652, 0.0
        %vm1741 = vcmp.lt.f32.partialorder %v653, 0.0
        %vm1742 = vcmp.lt.f32.partialorder %v654, 0.0
        %vm1743 = vcmp.lt.f32.partialorder %v655, 0.0
        %vm1744 = vcmp.lt.f32.partialorder %v656, 0.0
        %vm1745 = vcmp.lt.f32.partialorder %v657, 0.0
        %v1746 = vsub.f32 0.0, %v1682
        %v1747 = vsub.f32 0.0, %v1683
        %v1748 = vsub.f32 0.0, %v1684
        %v1749 = vsub.f32 0.0, %v1685
        %v1750 = vsub.f32 0.0, %v1686
        %v1751 = vsub.f32 0.0, %v1687
        %v1752 = vsub.f32 0.0, %v1688
        %v1753 = vsub.f32 0.0, %v1689
        %v1754 = vsub.f32 0.0, %v1690
        %v1755 = vsub.f32 0.0, %v1691
        %v1756 = vsub.f32 0.0, %v1692
        %v1757 = vsub.f32 0.0, %v1693
        %v1758 = vsub.f32 0.0, %v1694
        %v1759 = vsub.f32 0.0, %v1695
        %v1760 = vsub.f32 0.0, %v1696
        %v1761 = vsub.f32 0.0, %v1697
        %v1762 = vsub.f32 0.0, %v1698
        %v1763 = vsub.f32 0.0, %v1699
        %v1764 = vsub.f32 0.0, %v1700
        %v1765 = vsub.f32 0.0, %v1701
        %v1766 = vsub.f32 0.0, %v1702
        %v1767 = vsub.f32 0.0, %v1703
        %v1768 = vsub.f32 0.0, %v1704
        %v1769 = vsub.f32 0.0, %v1705
        %v1770 = vsub.f32 0.0, %v1706
        %v1771 = vsub.f32 0.0, %v1707
        %v1772 = vsub.f32 0.0, %v1708
        %v1773 = vsub.f32 0.0, %v1709
        %v1774 = vsub.f32 0.0, %v1710
        %v1775 = vsub.f32 0.0, %v1711
        %v1776 = vsub.f32 0.0, %v1712
        %v1777 = vsub.f32 0.0, %v1713
        %v1778 = vsel %vm1714, %v1746, %v1682
        %v1779 = vsel %vm1715, %v1747, %v1683
        %v1780 = vsel %vm1716, %v1748, %v1684
        %v1781 = vsel %vm1717, %v1749, %v1685
        %v1782 = vsel %vm1718, %v1750, %v1686
        %v1783 = vsel %vm1719, %v1751, %v1687
        %v1784 = vsel %vm1720, %v1752, %v1688
        %v1785 = vsel %vm1721, %v1753, %v1689
        %v1786 = vsel %vm1722, %v1754, %v1690
        %v1787 = vsel %vm1723, %v1755, %v1691
        %v1788 = vsel %vm1724, %v1756, %v1692
        %v1789 = vsel %vm1725, %v1757, %v1693
        %v1790 = vsel %vm1726, %v1758, %v1694
        %v1791 = vsel %vm1727, %v1759, %v1695
        %v1792 = vsel %vm1728, %v1760, %v1696
        %v1793 = vsel %vm1729, %v1761, %v1697
        %v1794 = vsel %vm1730, %v1762, %v1698
        %v1795 = vsel %vm1731, %v1763, %v1699
        %v1796 = vsel %vm1732, %v1764, %v1700
        %v1797 = vsel %vm1733, %v1765, %v1701
        %v1798 = vsel %vm1734, %v1766, %v1702
        %v1799 = vsel %vm1735, %v1767, %v1703
        %v1800 = vsel %vm1736, %v1768, %v1704
        %v1801 = vsel %vm1737, %v1769, %v1705
        %v1802 = vsel %vm1738, %v1770, %v1706
        %v1803 = vsel %vm1739, %v1771, %v1707
        %v1804 = vsel %vm1740, %v1772, %v1708
        %v1805 = vsel %vm1741, %v1773, %v1709
        %v1806 = vsel %vm1742, %v1774, %v1710
        %v1807 = vsel %vm1743, %v1775, %v1711
        %v1808 = vsel %vm1744, %v1776, %v1712
        %v1809 = vsel %vm1745, %v1777, %v1713
        %v1810 = vmul.f32 %v538, 0.5
        %v1811 = vmul.f32 %v587, 0.5
        %v1812 = vmul.f32 %v540, 0.5
        %v1813 = vmul.f32 %v589, 0.5
        %v1814 = vmul.f32 %v543, 0.5
        %v1815 = vmul.f32 %v592, 0.5
        %v1816 = vmul.f32 %v545, 0.5
        %v1817 = vmul.f32 %v594, 0.5
        %v1818 = vmul.f32 %v548, 0.5
        %v1819 = vmul.f32 %v597, 0.5
        %v1820 = vmul.f32 %v550, 0.5
        %v1821 = vmul.f32 %v599, 0.5
        %v1822 = vmul.f32 %v553, 0.5
        %v1823 = vmul.f32 %v602, 0.5
        %v1824 = vmul.f32 %v555, 0.5
        %v1825 = vmul.f32 %v604, 0.5
        %v1826 = vmul.f32 %v558, 0.5
        %v1827 = vmul.f32 %v607, 0.5
        %v1828 = vmul.f32 %v560, 0.5
        %v1829 = vmul.f32 %v609, 0.5
        %v1830 = vmul.f32 %v563, 0.5
        %v1831 = vmul.f32 %v612, 0.5
        %v1832 = vmul.f32 %v565, 0.5
        %v1833 = vmul.f32 %v614, 0.5
        %v1834 = vmul.f32 %v568, 0.5
        %v1835 = vmul.f32 %v617, 0.5
        %v1836 = vmul.f32 %v570, 0.5
        %v1837 = vmul.f32 %v619, 0.5
        %v1838 = vmul.f32 %v573, 0.5
        %v1839 = vmul.f32 %v622, 0.5
        %v1840 = vmul.f32 %v575, 0.5
        %v1841 = vmul.f32 %v624, 0.5
        %v1842 = vadd.f32 %v1778, 1.0
        %v1843 = vadd.f32 %v1779, 1.0
        %v1844 = vadd.f32 %v1780, 1.0
        %v1845 = vadd.f32 %v1781, 1.0
        %v1846 = vadd.f32 %v1782, 1.0
        %v1847 = vadd.f32 %v1783, 1.0
        %v1848 = vadd.f32 %v1784, 1.0
        %v1849 = vadd.f32 %v1785, 1.0
        %v1850 = vadd.f32 %v1786, 1.0
        %v1851 = vadd.f32 %v1787, 1.0
        %v1852 = vadd.f32 %v1788, 1.0
        %v1853 = vadd.f32 %v1789, 1.0
        %v1854 = vadd.f32 %v1790, 1.0
        %v1855 = vadd.f32 %v1791, 1.0
        %v1856 = vadd.f32 %v1792, 1.0
        %v1857 = vadd.f32 %v1793, 1.0
        %v1858 = vadd.f32 %v1794, 1.0
        %v1859 = vadd.f32 %v1795, 1.0
        %v1860 = vadd.f32 %v1796, 1.0
        %v1861 = vadd.f32 %v1797, 1.0
        %v1862 = vadd.f32 %v1798, 1.0
        %v1863 = vadd.f32 %v1799, 1.0
        %v1864 = vadd.f32 %v1800, 1.0
        %v1865 = vadd.f32 %v1801, 1.0
        %v1866 = vadd.f32 %v1802, 1.0
        %v1867 = vadd.f32 %v1803, 1.0
        %v1868 = vadd.f32 %v1804, 1.0
        %v1869 = vadd.f32 %v1805, 1.0
        %v1870 = vadd.f32 %v1806, 1.0
        %v1871 = vadd.f32 %v1807, 1.0
        %v1872 = vadd.f32 %v1808, 1.0
        %v1873 = vadd.f32 %v1809, 1.0
        %v1874 = vmul.f32 %v1810, %v1842
        %v1875 = vmul.f32 %v1811, %v1843
        %v1876 = vmul.f32 %v1812, %v1844
        %v1877 = vmul.f32 %v1813, %v1845
        %v1878 = vmul.f32 %v1814, %v1846
        %v1879 = vmul.f32 %v1815, %v1847
        %v1880 = vmul.f32 %v1816, %v1848
        %v1881 = vmul.f32 %v1817, %v1849
        %v1882 = vmul.f32 %v1818, %v1850
        %v1883 = vmul.f32 %v1819, %v1851
        %v1884 = vmul.f32 %v1820, %v1852
        %v1885 = vmul.f32 %v1821, %v1853
        %v1886 = vmul.f32 %v1822, %v1854
        %v1887 = vmul.f32 %v1823, %v1855
        %v1888 = vmul.f32 %v1824, %v1856
        %v1889 = vmul.f32 %v1825, %v1857
        %v1890 = vmul.f32 %v1826, %v1858
        %v1891 = vmul.f32 %v1827, %v1859
        %v1892 = vmul.f32 %v1828, %v1860
        %v1893 = vmul.f32 %v1829, %v1861
        %v1894 = vmul.f32 %v1830, %v1862
        %v1895 = vmul.f32 %v1831, %v1863
        %v1896 = vmul.f32 %v1832, %v1864
        %v1897 = vmul.f32 %v1833, %v1865
        %v1898 = vmul.f32 %v1834, %v1866
        %v1899 = vmul.f32 %v1835, %v1867
        %v1900 = vmul.f32 %v1836, %v1868
        %v1901 = vmul.f32 %v1837, %v1869
        %v1902 = vmul.f32 %v1838, %v1870
        %v1903 = vmul.f32 %v1839, %v1871
        %v1904 = vmul.f32 %v1840, %v1872
        %v1905 = vmul.f32 %v1841, %v1873
        %v1906 = vld [vmem:[#allocation2] sm:$0xff]
        %v1907 = vld [vmem:[#allocation2 + $0x8] sm:$0xff]
        %v1908 = vld [vmem:[#allocation2 + $0x10] sm:$0xff]
        %v1909 = vld [vmem:[#allocation2 + $0x18] sm:$0xff]
        %v1910 = vld [vmem:[#allocation2 + $0x20] sm:$0xff]
        %v1911 = vld [vmem:[#allocation2 + $0x28] sm:$0xff]
        %v1912 = vld [vmem:[#allocation2 + $0x30] sm:$0xff]
        %v1913 = vld [vmem:[#allocation2 + $0x38] sm:$0xff]
        %v1914 = vld [vmem:[#allocation2 + $0x40] sm:$0xff]
        %v1915 = vld [vmem:[#allocation2 + $0x48] sm:$0xff]
        %v1916 = vld [vmem:[#allocation2 + $0x50] sm:$0xff]
        %v1917 = vld [vmem:[#allocation2 + $0x58] sm:$0xff]
        %v1918 = vld [vmem:[#allocation2 + $0x60] sm:$0xff]
        %v1919 = vld [vmem:[#allocation2 + $0x68] sm:$0xff]
        %v1920 = vld [vmem:[#allocation2 + $0x70] sm:$0xff]
        %v1921 = vld [vmem:[#allocation2 + $0x78] sm:$0xff]
        %v1922 = vpack.c.bf16 %v1876, %v1874
        %v1923 = vpack.c.bf16 %v1877, %v1875
        %v1924 = vpack.c.bf16 %v1880, %v1878
        %v1925 = vpack.c.bf16 %v1881, %v1879
        %v1926 = vpack.c.bf16 %v1884, %v1882
        %v1927 = vpack.c.bf16 %v1885, %v1883
        %v1928 = vpack.c.bf16 %v1888, %v1886
        %v1929 = vpack.c.bf16 %v1889, %v1887
        %v1930 = vpack.c.bf16 %v1892, %v1890
        %v1931 = vpack.c.bf16 %v1893, %v1891
        %v1932 = vpack.c.bf16 %v1896, %v1894
        %v1933 = vpack.c.bf16 %v1897, %v1895
        %v1934 = vpack.c.bf16 %v1900, %v1898
        %v1935 = vpack.c.bf16 %v1901, %v1899
        %v1936 = vpack.c.bf16 %v1904, %v1902
        %v1937 = vpack.c.bf16 %v1905, %v1903
        %v1938 = vld [vmem:[%s334] sm:$0xf]
        %v1939 = vld [vmem:[%s334 + $0x4] sm:$0xf]
        %v1940 = vld [vmem:[%s334 + $0x8] sm:$0xf]
        %v1941 = vld [vmem:[%s334 + $0xc] sm:$0xf]
        %v1942 = vld [vmem:[%s334 + $0x10] sm:$0xf]
        %v1943 = vld [vmem:[%s334 + $0x14] sm:$0xf]
        %v1944 = vld [vmem:[%s334 + $0x18] sm:$0xf]
        %v1945 = vld [vmem:[%s334 + $0x1c] sm:$0xf]
        %v1946 = vld [vmem:[%s334 + $0x20] sm:$0xf]
        %v1947 = vld [vmem:[%s334 + $0x24] sm:$0xf]
        %v1948 = vld [vmem:[%s334 + $0x28] sm:$0xf]
        %v1949 = vld [vmem:[%s334 + $0x2c] sm:$0xf]
        %v1950 = vld [vmem:[%s334 + $0x30] sm:$0xf]
        %v1951 = vld [vmem:[%s334 + $0x34] sm:$0xf]
        %v1952 = vld [vmem:[%s334 + $0x38] sm:$0xf]
        %v1953 = vld [vmem:[%s334 + $0x3c] sm:$0xf]
        %v1954 = vld [vmem:[%s334 + $0x40] sm:$0xf]
        %v1955 = vld [vmem:[%s334 + $0x44] sm:$0xf]
        %v1956 = vld [vmem:[%s334 + $0x48] sm:$0xf]
        %v1957 = vld [vmem:[%s334 + $0x4c] sm:$0xf]
        %v1958 = vld [vmem:[%s334 + $0x50] sm:$0xf]
        %v1959 = vld [vmem:[%s334 + $0x54] sm:$0xf]
        %v1960 = vld [vmem:[%s334 + $0x58] sm:$0xf]
        %v1961 = vld [vmem:[%s334 + $0x5c] sm:$0xf]
        %v1962 = vld [vmem:[%s334 + $0x60] sm:$0xf]
        %v1963 = vld [vmem:[%s334 + $0x64] sm:$0xf]
        %v1964 = vld [vmem:[%s334 + $0x68] sm:$0xf]
        %v1965 = vld [vmem:[%s334 + $0x6c] sm:$0xf]
        %v1966 = vld [vmem:[%s334 + $0x70] sm:$0xf]
        %v1967 = vld [vmem:[%s334 + $0x74] sm:$0xf]
        %v1968 = vld [vmem:[%s334 + $0x78] sm:$0xf]
        %v1969 = vld [vmem:[%s334 + $0x7c] sm:$0xf]
        %v2002 = vunpack.c.l.b16 %v1938
        %v2003 = vunpack.c.l.b16 %v1939
        %v2004 = vunpack.c.l.b16 %v1940
        %v2005 = vunpack.c.l.b16 %v1941
        %v2006 = vunpack.c.l.b16 %v1942
        %v2007 = vunpack.c.l.b16 %v1943
        %v2008 = vunpack.c.l.b16 %v1944
        %v2009 = vunpack.c.l.b16 %v1945
        %v2010 = vunpack.c.l.b16 %v1946
        %v2011 = vunpack.c.l.b16 %v1947
        %v2012 = vunpack.c.l.b16 %v1948
        %v2013 = vunpack.c.l.b16 %v1949
        %v2014 = vunpack.c.l.b16 %v1950
        %v2015 = vunpack.c.l.b16 %v1951
        %v2016 = vunpack.c.l.b16 %v1952
        %v2017 = vunpack.c.l.b16 %v1953
        %v2018 = vunpack.c.l.b16 %v1954
        %v2019 = vunpack.c.l.b16 %v1955
        %v2020 = vunpack.c.l.b16 %v1956
        %v2021 = vunpack.c.l.b16 %v1957
        %v2022 = vunpack.c.l.b16 %v1958
        %v2023 = vunpack.c.l.b16 %v1959
        %v2024 = vunpack.c.l.b16 %v1960
        %v2025 = vunpack.c.l.b16 %v1961
        %v2026 = vunpack.c.l.b16 %v1962
        %v2027 = vunpack.c.l.b16 %v1963
        %v2028 = vunpack.c.l.b16 %v1964
        %v2029 = vunpack.c.l.b16 %v1965
        %v2030 = vunpack.c.l.b16 %v1966
        %v2031 = vunpack.c.l.b16 %v1967
        %v2032 = vunpack.c.l.b16 %v1968
        %v2033 = vunpack.c.l.b16 %v1969
        %v2034 = vpack.c.b16 %v2003, %v2002
        %v2035 = vpack.c.b16 %v2005, %v2004
        %v2036 = vpack.c.b16 %v2007, %v2006
        %v2037 = vpack.c.b16 %v2009, %v2008
        %v2038 = vpack.c.b16 %v2011, %v2010
        %v2039 = vpack.c.b16 %v2013, %v2012
        %v2040 = vpack.c.b16 %v2015, %v2014
        %v2041 = vpack.c.b16 %v2017, %v2016
        %v2042 = vpack.c.b16 %v2019, %v2018
        %v2043 = vpack.c.b16 %v2021, %v2020
        %v2044 = vpack.c.b16 %v2023, %v2022
        %v2045 = vpack.c.b16 %v2025, %v2024
        %v2046 = vpack.c.b16 %v2027, %v2026
        %v2047 = vpack.c.b16 %v2029, %v2028
        %v2048 = vpack.c.b16 %v2031, %v2030
        %v2049 = vpack.c.b16 %v2033, %v2032
        %2066 = vmatpush.bf16.msra.mxu0 %v2041
        %2067 = vmatpush.bf16.msra.mxu0 %v2040
        %2068 = vmatpush.bf16.msra.mxu0 %v2039
        %2069 = vmatpush.bf16.msra.mxu0 %v2038
        %2070 = vmatpush.bf16.msra.mxu0 %v2037
        %2071 = vmatpush.bf16.msra.mxu0 %v2036
        %2072 = vmatpush.bf16.msra.mxu0 %v2035
        %2073 = vmatpush.bf16.msra.mxu0 %v2034
        %2074 = vmatmul.bf16.gmra.mxu0 %v1922
        %v2075 = vpop.f32.mrf.mxu0
        %v2076 = vadd.f32 0.0, %v2075
        %v2077 = vpop.f32.mrf.mxu0
        %v2078 = vadd.f32 0.0, %v2077
        %2079 = vmatmul.bf16.gmra.mxu0 %v1924
        %v2080 = vpop.f32.mrf.mxu0
        %v2081 = vadd.f32 0.0, %v2080
        %v2082 = vpop.f32.mrf.mxu0
        %v2083 = vadd.f32 0.0, %v2082
        %2084 = vmatmul.bf16.gmra.mxu0 %v1926
        %v2085 = vpop.f32.mrf.mxu0
        %v2086 = vadd.f32 0.0, %v2085
        %v2087 = vpop.f32.mrf.mxu0
        %v2088 = vadd.f32 0.0, %v2087
        %2089 = vmatmul.bf16.gmra.mxu0 %v1928
        %v2090 = vpop.f32.mrf.mxu0
        %v2091 = vadd.f32 0.0, %v2090
        %v2092 = vpop.f32.mrf.mxu0
        %v2093 = vadd.f32 0.0, %v2092
        %2094 = vmatmul.bf16.gmra.mxu0 %v1930
        %v2095 = vpop.f32.mrf.mxu0
        %v2096 = vadd.f32 0.0, %v2095
        %v2097 = vpop.f32.mrf.mxu0
        %v2098 = vadd.f32 0.0, %v2097
        %2099 = vmatmul.bf16.gmra.mxu0 %v1932
        %v2100 = vpop.f32.mrf.mxu0
        %v2101 = vadd.f32 0.0, %v2100
        %v2102 = vpop.f32.mrf.mxu0
        %v2103 = vadd.f32 0.0, %v2102
        %2104 = vmatmul.bf16.gmra.mxu0 %v1934
        %v2105 = vpop.f32.mrf.mxu0
        %v2106 = vadd.f32 0.0, %v2105
        %v2107 = vpop.f32.mrf.mxu0
        %v2108 = vadd.f32 0.0, %v2107
        %2109 = vmatmul.bf16.gmra.mxu0 %v1936
        %v2110 = vpop.f32.mrf.mxu0
        %v2111 = vadd.f32 0.0, %v2110
        %v2112 = vpop.f32.mrf.mxu0
        %v2113 = vadd.f32 0.0, %v2112
        %2114 = vdwg.mxu0
        %2115 = vmatpush.bf16.msra.mxu0 %v2049
        %2116 = vmatpush.bf16.msra.mxu0 %v2048
        %2117 = vmatpush.bf16.msra.mxu0 %v2047
        %2118 = vmatpush.bf16.msra.mxu0 %v2046
        %2119 = vmatpush.bf16.msra.mxu0 %v2045
        %2120 = vmatpush.bf16.msra.mxu0 %v2044
        %2121 = vmatpush.bf16.msra.mxu0 %v2043
        %2122 = vmatpush.bf16.msra.mxu0 %v2042
        %2123 = vmatmul.bf16.gmra.mxu0 %v1923
        %v2124 = vpop.f32.mrf.mxu0
        %v2125 = vadd.f32 %v2076, %v2124
        %v2126 = vpop.f32.mrf.mxu0
        %v2127 = vadd.f32 %v2078, %v2126
        %2128 = vmatmul.bf16.gmra.mxu0 %v1925
        %v2129 = vpop.f32.mrf.mxu0
        %v2130 = vadd.f32 %v2081, %v2129
        %v2131 = vpop.f32.mrf.mxu0
        %v2132 = vadd.f32 %v2083, %v2131
        %2133 = vmatmul.bf16.gmra.mxu0 %v1927
        %v2134 = vpop.f32.mrf.mxu0
        %v2135 = vadd.f32 %v2086, %v2134
        %v2136 = vpop.f32.mrf.mxu0
        %v2137 = vadd.f32 %v2088, %v2136
        %2138 = vmatmul.bf16.gmra.mxu0 %v1929
        %v2139 = vpop.f32.mrf.mxu0
        %v2140 = vadd.f32 %v2091, %v2139
        %v2141 = vpop.f32.mrf.mxu0
        %v2142 = vadd.f32 %v2093, %v2141
        %2143 = vmatmul.bf16.gmra.mxu0 %v1931
        %v2144 = vpop.f32.mrf.mxu0
        %v2145 = vadd.f32 %v2096, %v2144
        %v2146 = vpop.f32.mrf.mxu0
        %v2147 = vadd.f32 %v2098, %v2146
        %2148 = vmatmul.bf16.gmra.mxu0 %v1933
        %v2149 = vpop.f32.mrf.mxu0
        %v2150 = vadd.f32 %v2101, %v2149
        %v2151 = vpop.f32.mrf.mxu0
        %v2152 = vadd.f32 %v2103, %v2151
        %2153 = vmatmul.bf16.gmra.mxu0 %v1935
        %v2154 = vpop.f32.mrf.mxu0
        %v2155 = vadd.f32 %v2106, %v2154
        %v2156 = vpop.f32.mrf.mxu0
        %v2157 = vadd.f32 %v2108, %v2156
        %2158 = vmatmul.bf16.gmra.mxu0 %v1937
        %v2159 = vpop.f32.mrf.mxu0
        %v2160 = vadd.f32 %v2111, %v2159
        %v2161 = vpop.f32.mrf.mxu0
        %v2162 = vadd.f32 %v2113, %v2161
        %2163 = vdwg.mxu0
        %v2164 = vadd.f32 %v1906, %v2125
        %v2165 = vadd.f32 %v1907, %v2127
        %v2166 = vadd.f32 %v1908, %v2130
        %v2167 = vadd.f32 %v1909, %v2132
        %v2168 = vadd.f32 %v1910, %v2135
        %v2169 = vadd.f32 %v1911, %v2137
        %v2170 = vadd.f32 %v1912, %v2140
        %v2171 = vadd.f32 %v1913, %v2142
        %v2172 = vadd.f32 %v1914, %v2145
        %v2173 = vadd.f32 %v1915, %v2147
        %v2174 = vadd.f32 %v1916, %v2150
        %v2175 = vadd.f32 %v1917, %v2152
        %v2176 = vadd.f32 %v1918, %v2155
        %v2177 = vadd.f32 %v1919, %v2157
        %v2178 = vadd.f32 %v1920, %v2160
        %v2179 = vadd.f32 %v1921, %v2162
        %2180 = vst [vmem:[#allocation2] sm:$0xff] %v2164
        %2181 = vst [vmem:[#allocation2 + $0x8] sm:$0xff] %v2165
        %2182 = vst [vmem:[#allocation2 + $0x10] sm:$0xff] %v2166
        %2183 = vst [vmem:[#allocation2 + $0x18] sm:$0xff] %v2167
        %2184 = vst [vmem:[#allocation2 + $0x20] sm:$0xff] %v2168
        %2185 = vst [vmem:[#allocation2 + $0x28] sm:$0xff] %v2169
        %2186 = vst [vmem:[#allocation2 + $0x30] sm:$0xff] %v2170
        %2187 = vst [vmem:[#allocation2 + $0x38] sm:$0xff] %v2171
        %2188 = vst [vmem:[#allocation2 + $0x40] sm:$0xff] %v2172
        %2189 = vst [vmem:[#allocation2 + $0x48] sm:$0xff] %v2173
        %2190 = vst [vmem:[#allocation2 + $0x50] sm:$0xff] %v2174
        %2191 = vst [vmem:[#allocation2 + $0x58] sm:$0xff] %v2175
        %2192 = vst [vmem:[#allocation2 + $0x60] sm:$0xff] %v2176
        %2193 = vst [vmem:[#allocation2 + $0x68] sm:$0xff] %v2177
        %2194 = vst [vmem:[#allocation2 + $0x70] sm:$0xff] %v2178
        %2195 = vst [vmem:[#allocation2 + $0x78] sm:$0xff] %v2179
        %p2196 = scmp.eq.s32.totalorder %s33, 1
        // Predicated region
        $region61: #{tpu_custom_call.1} parent=39 // pred_check
          %p2197 = pneg %p2196
        $region62: #{tpu_custom_call.1} parent=39 // pred_check_branch
          %2199 = sbr.rel (%p2197) target = $region64
        $region63: #{tpu_custom_call.1} parent=39 // pred_region
          %v2200 = vld [vmem:[#allocation2] sm:$0xff]
          %v2201 = vld [vmem:[#allocation2 + $0x8] sm:$0xff]
          %v2202 = vld [vmem:[#allocation2 + $0x10] sm:$0xff]
          %v2203 = vld [vmem:[#allocation2 + $0x18] sm:$0xff]
          %v2204 = vld [vmem:[#allocation2 + $0x20] sm:$0xff]
          %v2205 = vld [vmem:[#allocation2 + $0x28] sm:$0xff]
          %v2206 = vld [vmem:[#allocation2 + $0x30] sm:$0xff]
          %v2207 = vld [vmem:[#allocation2 + $0x38] sm:$0xff]
          %v2208 = vld [vmem:[#allocation2 + $0x40] sm:$0xff]
          %v2209 = vld [vmem:[#allocation2 + $0x48] sm:$0xff]
          %v2210 = vld [vmem:[#allocation2 + $0x50] sm:$0xff]
          %v2211 = vld [vmem:[#allocation2 + $0x58] sm:$0xff]
          %v2212 = vld [vmem:[#allocation2 + $0x60] sm:$0xff]
          %v2213 = vld [vmem:[#allocation2 + $0x68] sm:$0xff]
          %v2214 = vld [vmem:[#allocation2 + $0x70] sm:$0xff]
          %v2215 = vld [vmem:[#allocation2 + $0x78] sm:$0xff]
          %v2216 = vld [vmem:[%s4] sm:$0x1]
          %v2218 = vperm.slane %v2216, 0
          %v2220 = vadd.f32 %v2200, %v2218
          %v2221 = vadd.f32 %v2201, %v2218
          %v2222 = vadd.f32 %v2202, %v2218
          %v2223 = vadd.f32 %v2203, %v2218
          %v2224 = vadd.f32 %v2204, %v2218
          %v2225 = vadd.f32 %v2205, %v2218
          %v2226 = vadd.f32 %v2206, %v2218
          %v2227 = vadd.f32 %v2207, %v2218
          %v2228 = vadd.f32 %v2208, %v2218
          %v2229 = vadd.f32 %v2209, %v2218
          %v2230 = vadd.f32 %v2210, %v2218
          %v2231 = vadd.f32 %v2211, %v2218
          %v2232 = vadd.f32 %v2212, %v2218
          %v2233 = vadd.f32 %v2213, %v2218
          %v2234 = vadd.f32 %v2214, %v2218
          %v2235 = vadd.f32 %v2215, %v2218
          %v2236 = vadd.f32 %v2220, %v402
          %v2237 = vadd.f32 %v2221, %v403
          %v2238 = vadd.f32 %v2222, %v404
          %v2239 = vadd.f32 %v2223, %v405
          %v2240 = vadd.f32 %v2224, %v406
          %v2241 = vadd.f32 %v2225, %v407
          %v2242 = vadd.f32 %v2226, %v408
          %v2243 = vadd.f32 %v2227, %v409
          %v2244 = vadd.f32 %v2228, %v410
          %v2245 = vadd.f32 %v2229, %v411
          %v2246 = vadd.f32 %v2230, %v412
          %v2247 = vadd.f32 %v2231, %v413
          %v2248 = vadd.f32 %v2232, %v414
          %v2249 = vadd.f32 %v2233, %v415
          %v2250 = vadd.f32 %v2234, %v416
          %v2251 = vadd.f32 %v2235, %v417
          %2252 = vst [vmem:[%s376] sm:$0xff] %v2236
          %2253 = vst [vmem:[%s376 + $0x8] sm:$0xff] %v2237
          %2254 = vst [vmem:[%s376 + $0x10] sm:$0xff] %v2238
          %2255 = vst [vmem:[%s376 + $0x18] sm:$0xff] %v2239
          %2256 = vst [vmem:[%s376 + $0x20] sm:$0xff] %v2240
          %2257 = vst [vmem:[%s376 + $0x28] sm:$0xff] %v2241
          %2258 = vst [vmem:[%s376 + $0x30] sm:$0xff] %v2242
          %2259 = vst [vmem:[%s376 + $0x38] sm:$0xff] %v2243
          %2260 = vst [vmem:[%s376 + $0x40] sm:$0xff] %v2244
          %2261 = vst [vmem:[%s376 + $0x48] sm:$0xff] %v2245
          %2262 = vst [vmem:[%s376 + $0x50] sm:$0xff] %v2246
          %2263 = vst [vmem:[%s376 + $0x58] sm:$0xff] %v2247
          %2264 = vst [vmem:[%s376 + $0x60] sm:$0xff] %v2248
          %2265 = vst [vmem:[%s376 + $0x68] sm:$0xff] %v2249
          %2266 = vst [vmem:[%s376 + $0x70] sm:$0xff] %v2250
          %2267 = vst [vmem:[%s376 + $0x78] sm:$0xff] %v2251
        $region64: #{tpu_custom_call.1} parent=39 // pred_fallthru
          _
        %s2268 = sand.u32 %s173, 1
        %s2269 = scalar_lea.sflag [#allocation5], %s2268
        %s2270 = sand.u32 %s173, 1
        %s2271 = smul.addr %s2270, 128
        %s2272 = scalar_lea.vmem [#allocation11], %s2271
        // Predicated region
        $region65: #{tpu_custom_call.1} parent=39 // pred_check
          %p2273 = pneg %p183
        $region66: #{tpu_custom_call.1} parent=39 // pred_check_branch
          %2275 = sbr.rel (%p2273) target = $region68
        $region67: #{tpu_custom_call.1} parent=39 // pred_region
          %s2276 = smul.u32 16, %s32
          %2278 = vsyncadd %s2269, 0
          %s2279 = smul.addr %s2276, 8
          %s2280 = scalar_lea.hbm %s5, %s2279
          %s2281 = sshll.u32 %s2272, 4
          %s2282 = int_to_ptr.vmem [resolvable:$true] %s2281
          %s2283 = sshll.u32 %s2280, 4
          %s2284 = int_to_ptr.hbm [resolvable:$true] %s2283
          %2289 = dma.vmem_to_hbm [thread:$0]  %s2282, 2048, %s2284, %s2269, 128, 128, 8
        $region68: #{tpu_custom_call.1} parent=39 // pred_fallthru
          _
      $region40: #{tpu_custom_call.1} parent=5 // pred_fallthru
        _
      %p2290 = scmp.le.s32.totalorder 2, %s23
      // Predicated region
      $region69: #{tpu_custom_call.1} parent=5 // pred_check
        %p2291 = pneg %p2290
      $region70: #{tpu_custom_call.1} parent=5 // pred_check_branch
        %2293 = sbr.rel (%p2291) target = $region72
      $region71: #{tpu_custom_call.1} parent=5 // pred_region
        %s2294 = ssub.s32 %s23, 2
        // Predicated region
        $region73: #{tpu_custom_call.1} parent=71 // pred_check
          %p2295 = pneg %p189
        $region74: #{tpu_custom_call.1} parent=71 // pred_check_branch
          %2297 = sbr.rel (%p2295) target = $region76
        $region75: #{tpu_custom_call.1} parent=71 // pred_region
          %s2298 = sand.u32 %s174, 1
          %s2299 = scalar_lea.sflag [#allocation5], %s2298
          %s2300 = sand.u32 %s174, 1
          %s2301 = smul.addr %s2300, 128
          %s2302 = scalar_lea.vmem [#allocation11], %s2301
          %2304 = dma.done %s2299, 2048
        $region76: #{tpu_custom_call.1} parent=71 // pred_fallthru
          _
      $region72: #{tpu_custom_call.1} parent=5 // pred_fallthru
        _
    $region6: #{tpu_custom_call.1} parent=1 // loop_footer
      %s27 = sadd.s32 1, %s23
    $region7: #{tpu_custom_call.1} parent=1 // loop_footer_branch
      %22 = sbr.rel target = $region3
    $region8: #{tpu_custom_call.1} parent=1 // loop_exit
      _
    %2305 = vsyncpa [#allocation4], 1
    %s2306 = scalar_lea.sflag [#allocation4], 1
    %2307 = vsyncpa %s2306, 1
    %2308 = vsyncpa [#allocation7], 1
    %s2309 = scalar_lea.sflag [#allocation7], 1
    %2310 = vsyncpa %s2309, 1
    %2311 = vsyncpa [#allocation10], 1
    %s2312 = scalar_lea.sflag [#allocation10], 1
    %2313 = vsyncpa %s2312, 1
    %2314 = vsyncpa [#allocation5], 1
    %s2315 = scalar_lea.sflag [#allocation5], 1
    %2316 = vsyncpa %s2315, 1

</llo_original>
